<compile_context>
chip_gen: v7x
topology: tpu7x:2x2x1
jax: 0.10.0
libtpu: 0.0.40
codegen_flags: <defaults>
</compile_context>

<pallas_src>
import functools

import jax
import jax.numpy as jnp
from jax.experimental import pallas as pl
from jax.experimental.pallas import tpu as pltpu


def _rcu_kernel(x_ref, w1_ref, b1_ref, w2_ref, o_ref, *, H, W, C, mxu_dtype):
    """One image per grid step; everything stays in the lane-dense (C, H*W) layout.

    x_ref  : (1, C, H*W)  NCHW-flat activation (free reshape of NCHW in HBM)
    w1_ref : (9, C, C)    conv1 weight, tap-major (ky*3+kx) -> (Cout, Cin)
    b1_ref : (C, 1)       conv1 bias (broadcast over the H*W lanes)
    w2_ref : (9, C, C)    conv2 weight, same layout
    o_ref  : (1, C, H*W)  lane-dense output (NCHW-flat)
    """
    HW = H * W

    # Border-validity masks for the 8 shifted taps, computed once per grid
    # step and shared by conv1/conv2.  Row tests need no division:
    #   row >= 1     <=>  pos >= W
    #   row <= H-2   <=>  pos < (H-1)*W
    # Column index uses a bitwise AND when W is a power of two (true for all
    # RefineNet pyramid sizes), else an integer rem.
    pos = jax.lax.broadcasted_iota(jnp.int32, (1, HW), 1)
    if W & (W - 1) == 0:
        col = jnp.bitwise_and(pos, W - 1)
    else:
        col = pos % W
    not_first_col = col != 0             # needed when dx == -1
    not_last_col = col != (W - 1)        # needed when dx == +1
    not_first_row = pos >= W             # needed when dy == -1
    not_last_row = pos < (H - 1) * W     # needed when dy == +1

    masks = []
    for ky in range(3):
        for kx in range(3):
            dy, dx = ky - 1, kx - 1
            conds = []
            if dy == -1:
                conds.append(not_first_row)
            elif dy == 1:
                conds.append(not_last_row)
            if dx == -1:
                conds.append(not_first_col)
            elif dx == 1:
                conds.append(not_last_col)
            m = None
            for c in conds:
                m = c if m is None else jnp.logical_and(m, c)
            masks.append(m)   # None for the centre tap (no shift, no mask)

    def conv3x3(v, w_ref):
        # v: (C, H*W) f32.  SAME 3x3 conv:
        #   out[:, p] = sum_t W_t @ v[:, p + dy*W + dx]   (zero outside image)
        # Taps are lane rolls (XLU) + border masks; 9 accumulated MXU matmuls.
        acc = None
        for ky in range(3):
            for kx in range(3):
                t = ky * 3 + kx
                dy, dx = ky - 1, kx - 1
                s = dy * W + dx
                tap = v if s == 0 else pltpu.roll(v, shift=(-s) % HW, axis=1)
                if masks[t] is not None:
                    tap = jnp.where(masks[t], tap, 0.0)
                w_t = w_ref[t]                                    # (C, C)
                r = jnp.dot(w_t.astype(mxu_dtype), tap.astype(mxu_dtype),
                            preferred_element_type=jnp.float32)   # (C, H*W)
                acc = r if acc is None else acc + r
        return acc

    x = x_ref[0].astype(jnp.float32)                        # (C, H*W)
    h1 = conv3x3(jnp.maximum(x, 0.0), w1_ref) + b1_ref[...]  # conv1 + bias
    h1 = jnp.maximum(h1, 0.0)
    out = conv3x3(h1, w2_ref) + x                            # residual: un-relu'd x
    o_ref[0] = out.astype(o_ref.dtype)


def residual_conv_unit(x_nchw, w1_oihw, b1, w2_oihw, *, mxu_dtype=jnp.float32):
    """ResidualConvUnit forward.

    x_nchw : (N, C, H, W)       PyTorch layout
    w*     : (Cout, Cin, 3, 3)  PyTorch OIHW conv weights
    b1     : (C,)
    mxu_dtype: operand dtype for the MXU matmuls (f32 accumulation always).
               Use jnp.bfloat16 on v6e/v7x for ~2x+ MXU throughput at
               production C (loosens achievable tolerance to ~1e-2).
    """
    N, C, H, W = x_nchw.shape

    # Single, free-reshape NCHW-flat view of x (no transpose, no extra HBM pass).
    x_flat = x_nchw.reshape(N, C, H * W)

    # OIHW -> tap-major (9, Cout, Cin) matmul form (tiny host-side prep).
    w1 = jnp.transpose(w1_oihw, (2, 3, 0, 1)).reshape(9, C, C)
    w2 = jnp.transpose(w2_oihw, (2, 3, 0, 1)).reshape(9, C, C)
    b1r = b1.reshape(C, 1)

    kernel = functools.partial(_rcu_kernel, H=H, W=W, C=C, mxu_dtype=mxu_dtype)

    out = pl.pallas_call(
        kernel,
        out_shape=jax.ShapeDtypeStruct((N, C, H * W), x_nchw.dtype),
        grid_spec=pltpu.PrefetchScalarGridSpec(
            num_scalar_prefetch=0,
            grid=(N,),
            in_specs=[
                pl.BlockSpec((1, C, H * W), lambda n: (n, 0, 0)),
                # Weights/bias have constant index maps -> fetched once.
                # (pl.Buffered(1) would also drop their second VMEM buffer;
                #  irrelevant at this size, useful headroom at C=256 on v7x.)
                pl.BlockSpec((9, C, C), lambda n: (0, 0, 0)),
                pl.BlockSpec((C, 1), lambda n: (0, 0)),
                pl.BlockSpec((9, C, C), lambda n: (0, 0, 0)),
            ],
            out_specs=pl.BlockSpec((1, C, H * W), lambda n: (n, 0, 0)),
        ),
        compiler_params=pltpu.CompilerParams(
            dimension_semantics=("parallel",)),
    )(x_flat, w1, b1r, w2)

    # (N, C, H*W) -> (N, C, H, W): already NCHW, just a free reshape.
    return out.reshape(N, C, H, W)


if __name__ == "__main__":
    key = jax.random.PRNGKey(0)
    k1, k2, k3, k4 = jax.random.split(key, 4)

    N, C, H, W = 2, 4, 16, 16   # small RCU ("features"=4)
    x = jax.random.normal(k1, (N, C, H, W), jnp.float32)
    w1 = jax.random.normal(k2, (C, C, 3, 3), jnp.float32) * 0.1
    b1 = jax.random.normal(k3, (C,), jnp.float32) * 0.1
    w2 = jax.random.normal(k4, (C, C, 3, 3), jnp.float32) * 0.1

    out = residual_conv_unit(x, w1, b1, w2)
    out = jax.block_until_ready(out)

    # pure-JAX reference reproducing PyTorch NCHW semantics
    def ref(x, w1, b1, w2):
        dn = ("NCHW", "OIHW", "NCHW")
        h = jnp.maximum(x, 0.0)
        h = jax.lax.conv_general_dilated(h, w1, (1, 1), "SAME",
                                         dimension_numbers=dn)
        h = h + b1.reshape(1, C, 1, 1)
        h = jnp.maximum(h, 0.0)
        h = jax.lax.conv_general_dilated(h, w2, (1, 1), "SAME",
                                         dimension_numbers=dn)
        return h + x

    expected = ref(x, w1, b1, w2)
    max_err = float(jnp.max(jnp.abs(out - expected)))
    assert jnp.allclose(out, expected, atol=1e-4, rtol=1e-4), max_err
    print("KERNEL_OK")
</pallas_src>

<mosaic_0001>
module attributes {stable_mosaic.version = 11 : i64} {
  func.func @_rcu_kernel(%arg0: i32, %arg1: memref<1x4x256xf32, #tpu.memory_space<vmem>>, %arg2: memref<9x4x4xf32, #tpu.memory_space<vmem>>, %arg3: memref<4x1xf32, #tpu.memory_space<vmem>>, %arg4: memref<9x4x4xf32, #tpu.memory_space<vmem>>, %arg5: memref<1x4x256xf32, #tpu.memory_space<vmem>>) attributes {dimension_semantics = [#tpu.dimension_semantics<parallel>], iteration_bounds = array<i64: 2>, scalar_prefetch = 0 : i64, scratch_operands = 0 : i64, tpu.core_type = #tpu.core_type<tc>, window_params = [{transform_indices = @transform_0, window_bounds = array<i64: 1, 4, 256>}, {pipeline_mode = #tpu.pipeline_mode<synchronous>, transform_indices = @transform_1, window_bounds = array<i64: 9, 4, 4>}, {pipeline_mode = #tpu.pipeline_mode<synchronous>, transform_indices = @transform_2, window_bounds = array<i64: 4, 1>}, {pipeline_mode = #tpu.pipeline_mode<synchronous>, transform_indices = @transform_3, window_bounds = array<i64: 9, 4, 4>}, {transform_indices = @transform_4, window_bounds = array<i64: 1, 4, 256>}]} {
    %0 = tpu.iota {dimensions = array<i32: 1>} : vector<1x256xi32>
    %c15_i32 = arith.constant 15 : i32
    %1 = vector.broadcast %c15_i32 : i32 to vector<1x256xi32>
    %2 = arith.andi %0, %1 : vector<1x256xi32>
    %c0_i32 = arith.constant 0 : i32
    %3 = vector.broadcast %c0_i32 : i32 to vector<1x256xi32>
    %4 = arith.cmpi ne, %2, %3 : vector<1x256xi32>
    %c15_i32_0 = arith.constant 15 : i32
    %5 = vector.broadcast %c15_i32_0 : i32 to vector<1x256xi32>
    %6 = arith.cmpi ne, %2, %5 : vector<1x256xi32>
    %c16_i32 = arith.constant 16 : i32
    %7 = vector.broadcast %c16_i32 : i32 to vector<1x256xi32>
    %8 = arith.cmpi sge, %0, %7 : vector<1x256xi32>
    %c240_i32 = arith.constant 240 : i32
    %9 = vector.broadcast %c240_i32 : i32 to vector<1x256xi32>
    %10 = arith.cmpi slt, %0, %9 : vector<1x256xi32>
    %11 = arith.andi %8, %4 : vector<1x256xi1>
    %12 = arith.andi %8, %6 : vector<1x256xi1>
    %13 = arith.andi %10, %4 : vector<1x256xi1>
    %14 = arith.andi %10, %6 : vector<1x256xi1>
    %c0 = arith.constant 0 : index
    %c0_1 = arith.constant 0 : index
    %c0_2 = arith.constant 0 : index
    %15 = vector.load %arg1[%c0, %c0_1, %c0_2] : memref<1x4x256xf32, #tpu.memory_space<vmem>>, vector<1x4x256xf32>
    %16 = vector.shape_cast %15 : vector<1x4x256xf32> to vector<4x256xf32>
    %cst = arith.constant 0.000000e+00 : f32
    %17 = vector.broadcast %cst : f32 to vector<4x256xf32>
    %18 = arith.maximumf %16, %17 : vector<4x256xf32>
    %c17_i32 = arith.constant 17 : i32
    %19 = tpu.dynamic_rotate %18 by %c17_i32 dim 1 : vector<4x256xf32>, i32 -> vector<4x256xf32>
    %cst_3 = arith.constant 0.000000e+00 : f32
    %20 = vector.shape_cast %11 : vector<1x256xi1> to vector<1x256xi1>
    %21 = vector.broadcast %20 : vector<1x256xi1> to vector<4x256xi1>
    %22 = vector.broadcast %cst_3 : f32 to vector<4x256xf32>
    %23 = arith.select %21, %19, %22 : vector<4x256xi1>, vector<4x256xf32>
    %c0_4 = arith.constant 0 : index
    %c0_5 = arith.constant 0 : index
    %c0_6 = arith.constant 0 : index
    %24 = vector.load %arg2[%c0_4, %c0_5, %c0_6] : memref<9x4x4xf32, #tpu.memory_space<vmem>>, vector<1x4x4xf32>
    %25 = vector.shape_cast %24 : vector<1x4x4xf32> to vector<4x4xf32>
    %cst_7 = arith.constant dense<0.000000e+00> : vector<4x256xf32>
    %26 = tpu.matmul %25, %23, %cst_7 {dimension_numbers = #tpu.dot_dimension_numbers<[1], [0], [0], [1], [0, 0, 1, 1], [], []>} : vector<4x4xf32>, vector<4x256xf32>, vector<4x256xf32> -> vector<4x256xf32>
    %c16_i32_8 = arith.constant 16 : i32
    %27 = tpu.dynamic_rotate %18 by %c16_i32_8 dim 1 : vector<4x256xf32>, i32 -> vector<4x256xf32>
    %cst_9 = arith.constant 0.000000e+00 : f32
    %28 = vector.shape_cast %8 : vector<1x256xi1> to vector<1x256xi1>
    %29 = vector.broadcast %28 : vector<1x256xi1> to vector<4x256xi1>
    %30 = vector.broadcast %cst_9 : f32 to vector<4x256xf32>
    %31 = arith.select %29, %27, %30 : vector<4x256xi1>, vector<4x256xf32>
    %c1 = arith.constant 1 : index
    %c0_10 = arith.constant 0 : index
    %c0_11 = arith.constant 0 : index
    %32 = vector.load %arg2[%c1, %c0_10, %c0_11] : memref<9x4x4xf32, #tpu.memory_space<vmem>>, vector<1x4x4xf32>
    %33 = vector.shape_cast %32 : vector<1x4x4xf32> to vector<4x4xf32>
    %cst_12 = arith.constant dense<0.000000e+00> : vector<4x256xf32>
    %34 = tpu.matmul %33, %31, %cst_12 {dimension_numbers = #tpu.dot_dimension_numbers<[1], [0], [0], [1], [0, 0, 1, 1], [], []>} : vector<4x4xf32>, vector<4x256xf32>, vector<4x256xf32> -> vector<4x256xf32>
    %35 = arith.addf %26, %34 : vector<4x256xf32>
    %c15_i32_13 = arith.constant 15 : i32
    %36 = tpu.dynamic_rotate %18 by %c15_i32_13 dim 1 : vector<4x256xf32>, i32 -> vector<4x256xf32>
    %cst_14 = arith.constant 0.000000e+00 : f32
    %37 = vector.shape_cast %12 : vector<1x256xi1> to vector<1x256xi1>
    %38 = vector.broadcast %37 : vector<1x256xi1> to vector<4x256xi1>
    %39 = vector.broadcast %cst_14 : f32 to vector<4x256xf32>
    %40 = arith.select %38, %36, %39 : vector<4x256xi1>, vector<4x256xf32>
    %c2 = arith.constant 2 : index
    %c0_15 = arith.constant 0 : index
    %c0_16 = arith.constant 0 : index
    %41 = vector.load %arg2[%c2, %c0_15, %c0_16] : memref<9x4x4xf32, #tpu.memory_space<vmem>>, vector<1x4x4xf32>
    %42 = vector.shape_cast %41 : vector<1x4x4xf32> to vector<4x4xf32>
    %cst_17 = arith.constant dense<0.000000e+00> : vector<4x256xf32>
    %43 = tpu.matmul %42, %40, %cst_17 {dimension_numbers = #tpu.dot_dimension_numbers<[1], [0], [0], [1], [0, 0, 1, 1], [], []>} : vector<4x4xf32>, vector<4x256xf32>, vector<4x256xf32> -> vector<4x256xf32>
    %44 = arith.addf %35, %43 : vector<4x256xf32>
    %c1_i32 = arith.constant 1 : i32
    %45 = tpu.dynamic_rotate %18 by %c1_i32 dim 1 : vector<4x256xf32>, i32 -> vector<4x256xf32>
    %cst_18 = arith.constant 0.000000e+00 : f32
    %46 = vector.shape_cast %4 : vector<1x256xi1> to vector<1x256xi1>
    %47 = vector.broadcast %46 : vector<1x256xi1> to vector<4x256xi1>
    %48 = vector.broadcast %cst_18 : f32 to vector<4x256xf32>
    %49 = arith.select %47, %45, %48 : vector<4x256xi1>, vector<4x256xf32>
    %c3 = arith.constant 3 : index
    %c0_19 = arith.constant 0 : index
    %c0_20 = arith.constant 0 : index
    %50 = vector.load %arg2[%c3, %c0_19, %c0_20] : memref<9x4x4xf32, #tpu.memory_space<vmem>>, vector<1x4x4xf32>
    %51 = vector.shape_cast %50 : vector<1x4x4xf32> to vector<4x4xf32>
    %cst_21 = arith.constant dense<0.000000e+00> : vector<4x256xf32>
    %52 = tpu.matmul %51, %49, %cst_21 {dimension_numbers = #tpu.dot_dimension_numbers<[1], [0], [0], [1], [0, 0, 1, 1], [], []>} : vector<4x4xf32>, vector<4x256xf32>, vector<4x256xf32> -> vector<4x256xf32>
    %53 = arith.addf %44, %52 : vector<4x256xf32>
    %c4 = arith.constant 4 : index
    %c0_22 = arith.constant 0 : index
    %c0_23 = arith.constant 0 : index
    %54 = vector.load %arg2[%c4, %c0_22, %c0_23] : memref<9x4x4xf32, #tpu.memory_space<vmem>>, vector<1x4x4xf32>
    %55 = vector.shape_cast %54 : vector<1x4x4xf32> to vector<4x4xf32>
    %cst_24 = arith.constant dense<0.000000e+00> : vector<4x256xf32>
    %56 = tpu.matmul %55, %18, %cst_24 {dimension_numbers = #tpu.dot_dimension_numbers<[1], [0], [0], [1], [0, 0, 1, 1], [], []>} : vector<4x4xf32>, vector<4x256xf32>, vector<4x256xf32> -> vector<4x256xf32>
    %57 = arith.addf %53, %56 : vector<4x256xf32>
    %c255_i32 = arith.constant 255 : i32
    %58 = tpu.dynamic_rotate %18 by %c255_i32 dim 1 : vector<4x256xf32>, i32 -> vector<4x256xf32>
    %cst_25 = arith.constant 0.000000e+00 : f32
    %59 = vector.shape_cast %6 : vector<1x256xi1> to vector<1x256xi1>
    %60 = vector.broadcast %59 : vector<1x256xi1> to vector<4x256xi1>
    %61 = vector.broadcast %cst_25 : f32 to vector<4x256xf32>
    %62 = arith.select %60, %58, %61 : vector<4x256xi1>, vector<4x256xf32>
    %c5 = arith.constant 5 : index
    %c0_26 = arith.constant 0 : index
    %c0_27 = arith.constant 0 : index
    %63 = vector.load %arg2[%c5, %c0_26, %c0_27] : memref<9x4x4xf32, #tpu.memory_space<vmem>>, vector<1x4x4xf32>
    %64 = vector.shape_cast %63 : vector<1x4x4xf32> to vector<4x4xf32>
    %cst_28 = arith.constant dense<0.000000e+00> : vector<4x256xf32>
    %65 = tpu.matmul %64, %62, %cst_28 {dimension_numbers = #tpu.dot_dimension_numbers<[1], [0], [0], [1], [0, 0, 1, 1], [], []>} : vector<4x4xf32>, vector<4x256xf32>, vector<4x256xf32> -> vector<4x256xf32>
    %66 = arith.addf %57, %65 : vector<4x256xf32>
    %c241_i32 = arith.constant 241 : i32
    %67 = tpu.dynamic_rotate %18 by %c241_i32 dim 1 : vector<4x256xf32>, i32 -> vector<4x256xf32>
    %cst_29 = arith.constant 0.000000e+00 : f32
    %68 = vector.shape_cast %13 : vector<1x256xi1> to vector<1x256xi1>
    %69 = vector.broadcast %68 : vector<1x256xi1> to vector<4x256xi1>
    %70 = vector.broadcast %cst_29 : f32 to vector<4x256xf32>
    %71 = arith.select %69, %67, %70 : vector<4x256xi1>, vector<4x256xf32>
    %c6 = arith.constant 6 : index
    %c0_30 = arith.constant 0 : index
    %c0_31 = arith.constant 0 : index
    %72 = vector.load %arg2[%c6, %c0_30, %c0_31] : memref<9x4x4xf32, #tpu.memory_space<vmem>>, vector<1x4x4xf32>
    %73 = vector.shape_cast %72 : vector<1x4x4xf32> to vector<4x4xf32>
    %cst_32 = arith.constant dense<0.000000e+00> : vector<4x256xf32>
    %74 = tpu.matmul %73, %71, %cst_32 {dimension_numbers = #tpu.dot_dimension_numbers<[1], [0], [0], [1], [0, 0, 1, 1], [], []>} : vector<4x4xf32>, vector<4x256xf32>, vector<4x256xf32> -> vector<4x256xf32>
    %75 = arith.addf %66, %74 : vector<4x256xf32>
    %c240_i32_33 = arith.constant 240 : i32
    %76 = tpu.dynamic_rotate %18 by %c240_i32_33 dim 1 : vector<4x256xf32>, i32 -> vector<4x256xf32>
    %cst_34 = arith.constant 0.000000e+00 : f32
    %77 = vector.shape_cast %10 : vector<1x256xi1> to vector<1x256xi1>
    %78 = vector.broadcast %77 : vector<1x256xi1> to vector<4x256xi1>
    %79 = vector.broadcast %cst_34 : f32 to vector<4x256xf32>
    %80 = arith.select %78, %76, %79 : vector<4x256xi1>, vector<4x256xf32>
    %c7 = arith.constant 7 : index
    %c0_35 = arith.constant 0 : index
    %c0_36 = arith.constant 0 : index
    %81 = vector.load %arg2[%c7, %c0_35, %c0_36] : memref<9x4x4xf32, #tpu.memory_space<vmem>>, vector<1x4x4xf32>
    %82 = vector.shape_cast %81 : vector<1x4x4xf32> to vector<4x4xf32>
    %cst_37 = arith.constant dense<0.000000e+00> : vector<4x256xf32>
    %83 = tpu.matmul %82, %80, %cst_37 {dimension_numbers = #tpu.dot_dimension_numbers<[1], [0], [0], [1], [0, 0, 1, 1], [], []>} : vector<4x4xf32>, vector<4x256xf32>, vector<4x256xf32> -> vector<4x256xf32>
    %84 = arith.addf %75, %83 : vector<4x256xf32>
    %c239_i32 = arith.constant 239 : i32
    %85 = tpu.dynamic_rotate %18 by %c239_i32 dim 1 : vector<4x256xf32>, i32 -> vector<4x256xf32>
    %cst_38 = arith.constant 0.000000e+00 : f32
    %86 = vector.shape_cast %14 : vector<1x256xi1> to vector<1x256xi1>
    %87 = vector.broadcast %86 : vector<1x256xi1> to vector<4x256xi1>
    %88 = vector.broadcast %cst_38 : f32 to vector<4x256xf32>
    %89 = arith.select %87, %85, %88 : vector<4x256xi1>, vector<4x256xf32>
    %c8 = arith.constant 8 : index
    %c0_39 = arith.constant 0 : index
    %c0_40 = arith.constant 0 : index
    %90 = vector.load %arg2[%c8, %c0_39, %c0_40] : memref<9x4x4xf32, #tpu.memory_space<vmem>>, vector<1x4x4xf32>
    %91 = vector.shape_cast %90 : vector<1x4x4xf32> to vector<4x4xf32>
    %cst_41 = arith.constant dense<0.000000e+00> : vector<4x256xf32>
    %92 = tpu.matmul %91, %89, %cst_41 {dimension_numbers = #tpu.dot_dimension_numbers<[1], [0], [0], [1], [0, 0, 1, 1], [], []>} : vector<4x4xf32>, vector<4x256xf32>, vector<4x256xf32> -> vector<4x256xf32>
    %93 = arith.addf %84, %92 : vector<4x256xf32>
    %c0_42 = arith.constant 0 : index
    %c0_43 = arith.constant 0 : index
    %94 = vector.load %arg3[%c0_42, %c0_43] : memref<4x1xf32, #tpu.memory_space<vmem>>, vector<4x1xf32>
    %95 = vector.broadcast %94 : vector<4x1xf32> to vector<4x256xf32>
    %96 = arith.addf %93, %95 : vector<4x256xf32>
    %cst_44 = arith.constant 0.000000e+00 : f32
    %97 = vector.broadcast %cst_44 : f32 to vector<4x256xf32>
    %98 = arith.maximumf %96, %97 : vector<4x256xf32>
    %c17_i32_45 = arith.constant 17 : i32
    %99 = tpu.dynamic_rotate %98 by %c17_i32_45 dim 1 : vector<4x256xf32>, i32 -> vector<4x256xf32>
    %cst_46 = arith.constant 0.000000e+00 : f32
    %100 = vector.shape_cast %11 : vector<1x256xi1> to vector<1x256xi1>
    %101 = vector.broadcast %100 : vector<1x256xi1> to vector<4x256xi1>
    %102 = vector.broadcast %cst_46 : f32 to vector<4x256xf32>
    %103 = arith.select %101, %99, %102 : vector<4x256xi1>, vector<4x256xf32>
    %c0_47 = arith.constant 0 : index
    %c0_48 = arith.constant 0 : index
    %c0_49 = arith.constant 0 : index
    %104 = vector.load %arg4[%c0_47, %c0_48, %c0_49] : memref<9x4x4xf32, #tpu.memory_space<vmem>>, vector<1x4x4xf32>
    %105 = vector.shape_cast %104 : vector<1x4x4xf32> to vector<4x4xf32>
    %cst_50 = arith.constant dense<0.000000e+00> : vector<4x256xf32>
    %106 = tpu.matmul %105, %103, %cst_50 {dimension_numbers = #tpu.dot_dimension_numbers<[1], [0], [0], [1], [0, 0, 1, 1], [], []>} : vector<4x4xf32>, vector<4x256xf32>, vector<4x256xf32> -> vector<4x256xf32>
    %c16_i32_51 = arith.constant 16 : i32
    %107 = tpu.dynamic_rotate %98 by %c16_i32_51 dim 1 : vector<4x256xf32>, i32 -> vector<4x256xf32>
    %cst_52 = arith.constant 0.000000e+00 : f32
    %108 = vector.shape_cast %8 : vector<1x256xi1> to vector<1x256xi1>
    %109 = vector.broadcast %108 : vector<1x256xi1> to vector<4x256xi1>
    %110 = vector.broadcast %cst_52 : f32 to vector<4x256xf32>
    %111 = arith.select %109, %107, %110 : vector<4x256xi1>, vector<4x256xf32>
    %c1_53 = arith.constant 1 : index
    %c0_54 = arith.constant 0 : index
    %c0_55 = arith.constant 0 : index
    %112 = vector.load %arg4[%c1_53, %c0_54, %c0_55] : memref<9x4x4xf32, #tpu.memory_space<vmem>>, vector<1x4x4xf32>
    %113 = vector.shape_cast %112 : vector<1x4x4xf32> to vector<4x4xf32>
    %cst_56 = arith.constant dense<0.000000e+00> : vector<4x256xf32>
    %114 = tpu.matmul %113, %111, %cst_56 {dimension_numbers = #tpu.dot_dimension_numbers<[1], [0], [0], [1], [0, 0, 1, 1], [], []>} : vector<4x4xf32>, vector<4x256xf32>, vector<4x256xf32> -> vector<4x256xf32>
    %115 = arith.addf %106, %114 : vector<4x256xf32>
    %c15_i32_57 = arith.constant 15 : i32
    %116 = tpu.dynamic_rotate %98 by %c15_i32_57 dim 1 : vector<4x256xf32>, i32 -> vector<4x256xf32>
    %cst_58 = arith.constant 0.000000e+00 : f32
    %117 = vector.shape_cast %12 : vector<1x256xi1> to vector<1x256xi1>
    %118 = vector.broadcast %117 : vector<1x256xi1> to vector<4x256xi1>
    %119 = vector.broadcast %cst_58 : f32 to vector<4x256xf32>
    %120 = arith.select %118, %116, %119 : vector<4x256xi1>, vector<4x256xf32>
    %c2_59 = arith.constant 2 : index
    %c0_60 = arith.constant 0 : index
    %c0_61 = arith.constant 0 : index
    %121 = vector.load %arg4[%c2_59, %c0_60, %c0_61] : memref<9x4x4xf32, #tpu.memory_space<vmem>>, vector<1x4x4xf32>
    %122 = vector.shape_cast %121 : vector<1x4x4xf32> to vector<4x4xf32>
    %cst_62 = arith.constant dense<0.000000e+00> : vector<4x256xf32>
    %123 = tpu.matmul %122, %120, %cst_62 {dimension_numbers = #tpu.dot_dimension_numbers<[1], [0], [0], [1], [0, 0, 1, 1], [], []>} : vector<4x4xf32>, vector<4x256xf32>, vector<4x256xf32> -> vector<4x256xf32>
    %124 = arith.addf %115, %123 : vector<4x256xf32>
    %c1_i32_63 = arith.constant 1 : i32
    %125 = tpu.dynamic_rotate %98 by %c1_i32_63 dim 1 : vector<4x256xf32>, i32 -> vector<4x256xf32>
    %cst_64 = arith.constant 0.000000e+00 : f32
    %126 = vector.shape_cast %4 : vector<1x256xi1> to vector<1x256xi1>
    %127 = vector.broadcast %126 : vector<1x256xi1> to vector<4x256xi1>
    %128 = vector.broadcast %cst_64 : f32 to vector<4x256xf32>
    %129 = arith.select %127, %125, %128 : vector<4x256xi1>, vector<4x256xf32>
    %c3_65 = arith.constant 3 : index
    %c0_66 = arith.constant 0 : index
    %c0_67 = arith.constant 0 : index
    %130 = vector.load %arg4[%c3_65, %c0_66, %c0_67] : memref<9x4x4xf32, #tpu.memory_space<vmem>>, vector<1x4x4xf32>
    %131 = vector.shape_cast %130 : vector<1x4x4xf32> to vector<4x4xf32>
    %cst_68 = arith.constant dense<0.000000e+00> : vector<4x256xf32>
    %132 = tpu.matmul %131, %129, %cst_68 {dimension_numbers = #tpu.dot_dimension_numbers<[1], [0], [0], [1], [0, 0, 1, 1], [], []>} : vector<4x4xf32>, vector<4x256xf32>, vector<4x256xf32> -> vector<4x256xf32>
    %133 = arith.addf %124, %132 : vector<4x256xf32>
    %c4_69 = arith.constant 4 : index
    %c0_70 = arith.constant 0 : index
    %c0_71 = arith.constant 0 : index
    %134 = vector.load %arg4[%c4_69, %c0_70, %c0_71] : memref<9x4x4xf32, #tpu.memory_space<vmem>>, vector<1x4x4xf32>
    %135 = vector.shape_cast %134 : vector<1x4x4xf32> to vector<4x4xf32>
    %cst_72 = arith.constant dense<0.000000e+00> : vector<4x256xf32>
    %136 = tpu.matmul %135, %98, %cst_72 {dimension_numbers = #tpu.dot_dimension_numbers<[1], [0], [0], [1], [0, 0, 1, 1], [], []>} : vector<4x4xf32>, vector<4x256xf32>, vector<4x256xf32> -> vector<4x256xf32>
    %137 = arith.addf %133, %136 : vector<4x256xf32>
    %c255_i32_73 = arith.constant 255 : i32
    %138 = tpu.dynamic_rotate %98 by %c255_i32_73 dim 1 : vector<4x256xf32>, i32 -> vector<4x256xf32>
    %cst_74 = arith.constant 0.000000e+00 : f32
    %139 = vector.shape_cast %6 : vector<1x256xi1> to vector<1x256xi1>
    %140 = vector.broadcast %139 : vector<1x256xi1> to vector<4x256xi1>
    %141 = vector.broadcast %cst_74 : f32 to vector<4x256xf32>
    %142 = arith.select %140, %138, %141 : vector<4x256xi1>, vector<4x256xf32>
    %c5_75 = arith.constant 5 : index
    %c0_76 = arith.constant 0 : index
    %c0_77 = arith.constant 0 : index
    %143 = vector.load %arg4[%c5_75, %c0_76, %c0_77] : memref<9x4x4xf32, #tpu.memory_space<vmem>>, vector<1x4x4xf32>
    %144 = vector.shape_cast %143 : vector<1x4x4xf32> to vector<4x4xf32>
    %cst_78 = arith.constant dense<0.000000e+00> : vector<4x256xf32>
    %145 = tpu.matmul %144, %142, %cst_78 {dimension_numbers = #tpu.dot_dimension_numbers<[1], [0], [0], [1], [0, 0, 1, 1], [], []>} : vector<4x4xf32>, vector<4x256xf32>, vector<4x256xf32> -> vector<4x256xf32>
    %146 = arith.addf %137, %145 : vector<4x256xf32>
    %c241_i32_79 = arith.constant 241 : i32
    %147 = tpu.dynamic_rotate %98 by %c241_i32_79 dim 1 : vector<4x256xf32>, i32 -> vector<4x256xf32>
    %cst_80 = arith.constant 0.000000e+00 : f32
    %148 = vector.shape_cast %13 : vector<1x256xi1> to vector<1x256xi1>
    %149 = vector.broadcast %148 : vector<1x256xi1> to vector<4x256xi1>
    %150 = vector.broadcast %cst_80 : f32 to vector<4x256xf32>
    %151 = arith.select %149, %147, %150 : vector<4x256xi1>, vector<4x256xf32>
    %c6_81 = arith.constant 6 : index
    %c0_82 = arith.constant 0 : index
    %c0_83 = arith.constant 0 : index
    %152 = vector.load %arg4[%c6_81, %c0_82, %c0_83] : memref<9x4x4xf32, #tpu.memory_space<vmem>>, vector<1x4x4xf32>
    %153 = vector.shape_cast %152 : vector<1x4x4xf32> to vector<4x4xf32>
    %cst_84 = arith.constant dense<0.000000e+00> : vector<4x256xf32>
    %154 = tpu.matmul %153, %151, %cst_84 {dimension_numbers = #tpu.dot_dimension_numbers<[1], [0], [0], [1], [0, 0, 1, 1], [], []>} : vector<4x4xf32>, vector<4x256xf32>, vector<4x256xf32> -> vector<4x256xf32>
    %155 = arith.addf %146, %154 : vector<4x256xf32>
    %c240_i32_85 = arith.constant 240 : i32
    %156 = tpu.dynamic_rotate %98 by %c240_i32_85 dim 1 : vector<4x256xf32>, i32 -> vector<4x256xf32>
    %cst_86 = arith.constant 0.000000e+00 : f32
    %157 = vector.shape_cast %10 : vector<1x256xi1> to vector<1x256xi1>
    %158 = vector.broadcast %157 : vector<1x256xi1> to vector<4x256xi1>
    %159 = vector.broadcast %cst_86 : f32 to vector<4x256xf32>
    %160 = arith.select %158, %156, %159 : vector<4x256xi1>, vector<4x256xf32>
    %c7_87 = arith.constant 7 : index
    %c0_88 = arith.constant 0 : index
    %c0_89 = arith.constant 0 : index
    %161 = vector.load %arg4[%c7_87, %c0_88, %c0_89] : memref<9x4x4xf32, #tpu.memory_space<vmem>>, vector<1x4x4xf32>
    %162 = vector.shape_cast %161 : vector<1x4x4xf32> to vector<4x4xf32>
    %cst_90 = arith.constant dense<0.000000e+00> : vector<4x256xf32>
    %163 = tpu.matmul %162, %160, %cst_90 {dimension_numbers = #tpu.dot_dimension_numbers<[1], [0], [0], [1], [0, 0, 1, 1], [], []>} : vector<4x4xf32>, vector<4x256xf32>, vector<4x256xf32> -> vector<4x256xf32>
    %164 = arith.addf %155, %163 : vector<4x256xf32>
    %c239_i32_91 = arith.constant 239 : i32
    %165 = tpu.dynamic_rotate %98 by %c239_i32_91 dim 1 : vector<4x256xf32>, i32 -> vector<4x256xf32>
    %cst_92 = arith.constant 0.000000e+00 : f32
    %166 = vector.shape_cast %14 : vector<1x256xi1> to vector<1x256xi1>
    %167 = vector.broadcast %166 : vector<1x256xi1> to vector<4x256xi1>
    %168 = vector.broadcast %cst_92 : f32 to vector<4x256xf32>
    %169 = arith.select %167, %165, %168 : vector<4x256xi1>, vector<4x256xf32>
    %c8_93 = arith.constant 8 : index
    %c0_94 = arith.constant 0 : index
    %c0_95 = arith.constant 0 : index
    %170 = vector.load %arg4[%c8_93, %c0_94, %c0_95] : memref<9x4x4xf32, #tpu.memory_space<vmem>>, vector<1x4x4xf32>
    %171 = vector.shape_cast %170 : vector<1x4x4xf32> to vector<4x4xf32>
    %cst_96 = arith.constant dense<0.000000e+00> : vector<4x256xf32>
    %172 = tpu.matmul %171, %169, %cst_96 {dimension_numbers = #tpu.dot_dimension_numbers<[1], [0], [0], [1], [0, 0, 1, 1], [], []>} : vector<4x4xf32>, vector<4x256xf32>, vector<4x256xf32> -> vector<4x256xf32>
    %173 = arith.addf %164, %172 : vector<4x256xf32>
    %174 = arith.addf %173, %16 : vector<4x256xf32>
    %c0_97 = arith.constant 0 : index
    %c0_98 = arith.constant 0 : index
    %c0_99 = arith.constant 0 : index
    %175 = vector.load %arg5[%c0_97, %c0_98, %c0_99] : memref<1x4x256xf32, #tpu.memory_space<vmem>>, vector<1x4x256xf32>
    %176 = vector.shape_cast %175 : vector<1x4x256xf32> to vector<4x256xf32>
    %177 = vector.shape_cast %174 : vector<4x256xf32> to vector<1x4x256xf32>
    tpu.vector_store %arg5[%c0_97, %c0_98, %c0_99], %177 {strides = array<i32>} : memref<1x4x256xf32, #tpu.memory_space<vmem>>, vector<1x4x256xf32>,
    return
  }
  func.func @transform_0(%arg0: i32) -> (i32, i32, i32) {
    %c0_i32 = arith.constant 0 : i32
    %c0_i32_0 = arith.constant 0 : i32
    %c0_i32_1 = arith.constant 0 : i32
    return %arg0, %c0_i32, %c0_i32_0 : i32, i32, i32
  }
  func.func @transform_1(%arg0: i32) -> (i32, i32, i32) {
    %c0_i32 = arith.constant 0 : i32
    %c0_i32_0 = arith.constant 0 : i32
    %c0_i32_1 = arith.constant 0 : i32
    %c0_i32_2 = arith.constant 0 : i32
    return %c0_i32, %c0_i32_0, %c0_i32_1 : i32, i32, i32
  }
  func.func @transform_2(%arg0: i32) -> (i32, i32) {
    %c0_i32 = arith.constant 0 : i32
    %c0_i32_0 = arith.constant 0 : i32
    %c0_i32_1 = arith.constant 0 : i32
    return %c0_i32, %c0_i32_0 : i32, i32
  }
  func.func @transform_3(%arg0: i32) -> (i32, i32, i32) {
    %c0_i32 = arith.constant 0 : i32
    %c0_i32_0 = arith.constant 0 : i32
    %c0_i32_1 = arith.constant 0 : i32
    %c0_i32_2 = arith.constant 0 : i32
    return %c0_i32, %c0_i32_0, %c0_i32_1 : i32, i32, i32
  }
  func.func @transform_4(%arg0: i32) -> (i32, i32, i32) {
    %c0_i32 = arith.constant 0 : i32
    %c0_i32_0 = arith.constant 0 : i32
    %c0_i32_1 = arith.constant 0 : i32
    return %arg0, %c0_i32, %c0_i32_0 : i32, i32, i32
  }
}

</mosaic_0001>

<llo_original>
// kernel: tpu_custom_call.1
$region0: #{tpu_custom_call.1}
  #allocation0 [shape = 'u32[]', space=smem, size = 0x4, offset = 0x4, fixed_abs, tag = 'smem constant byte address 0x4 - core index']
  #allocation1 [shape = 'u32[144,128]{1,0:T(1,128)}', space=vmem, size = 0x12000, scoped, tag = 'internal scratch']
  %s0 = inlined_call_operand.vmem [shape: f32[2,4,256], index: 0, kind: input, shape index: {}]
  %s1 = inlined_call_operand.vmem [shape: f32[9,4,4], index: 1, kind: input, shape index: {}]
  %s2 = inlined_call_operand.vmem [shape: f32[4,1], index: 2, kind: input, shape index: {}]
  %s3 = inlined_call_operand.vmem [shape: f32[9,4,4], index: 3, kind: input, shape index: {}]
  %s4 = inlined_call_operand.hbm [shape: f32[2,4,256], index: 4, kind: output, shape index: {}]
  %s5 = sld [smem:[#allocation0]]
  $region49: #{tpu_custom_call.1} parent=0
    _
  %s7 = ssub.s32 1, %s5
  %s8 = scalar_select 0, %s7, %s5
  $region1: #{tpu_custom_call.1} parent=0
    #allocation2 [shape = 'u8[8192]{0}', space=vmem, size = 0x2000, scoped, tag = 'output window, operand 0']
    #allocation3 [shape = 's32[2]{0}', space=sflag, size = 0x8, scoped, tag = 'scoped memory for tpu_custom_call.1']
    %9 = vsyncpa [#allocation3], 0
    %s10 = scalar_lea.sflag [#allocation3], 1
    %11 = vsyncpa %s10, 0
    loop: start=0, step=1, limit=4
    $region2: #{tpu_custom_call.1} parent=1 // loop_pre_header
      _
    $region3: #{tpu_custom_call.1} parent=1 // loop_header
      %s13 = sphi 0, %s17
      %p14 = scmp.ge.s32.totalorder %s13, 4
      %s23 = sphi 0, %s25
      %s26 = sphi 0, %s23
      %s27 = sphi 0, %s26
      %s43 = sphi 0, %s27
      %s47 = sphi 0, %s47
      %s49 = sphi 0, %s47
      %s50 = sphi 0, %s49
      %s64 = sphi 0, %s50
      %s68 = sphi 0, %s68
      %s70 = sphi 0, %s68
      %s71 = sphi 0, %s70
      %s85 = sphi 0, %s71
      %s89 = sphi 0, %s89
      %s91 = sphi 0, %s89
      %s92 = sphi 0, %s91
      %s106 = sphi 0, %s92
      %s112 = sphi 0, %s114
      %s115 = sphi 0, %s112
      %s116 = sphi 0, %s115
      %s132 = sphi 0, %s116
    $region4: #{tpu_custom_call.1} parent=1 // loop_header_branch
      %16 = sbr.rel (%p14) target = $region8
    $region5: #{tpu_custom_call.1} parent=1 // loop_body
      %s18 = ssub.s32 %s13, 1
      %s19 = ssub.s32 %s13, 2
      %s20 = sadd.s32 %s13, 1
      %s21 = ssub.s32 %s13, %s20
      %p22 = scmp.eq.s32.totalorder %s21, 0
      %s24 = sadd.s32 %s23, 1
      %s25 = scalar_select %p22, %s23, %s24
      %p28 = pneg %p22
      %p29 = scmp.eq.s32.totalorder %s13, 1
      %p30 = por %p28, %p29
      %p31 = scmp.ne.s32.totalorder %s23, %s26
      %p32 = scmp.eq.s32.totalorder %s13, 0
      %p33 = por %p31, %p32
      %p34 = scmp.ne.s32.totalorder %s23, %s26
      %p35 = scmp.eq.s32.totalorder %s18, 1
      %p36 = por %p34, %p35
      %p37 = scmp.ne.s32.totalorder %s26, %s27
      %p38 = scmp.eq.s32.totalorder %s18, 0
      %p39 = por %p37, %p38
      %p40 = scmp.ne.s32.totalorder %s26, %s27
      %p41 = scmp.eq.s32.totalorder %s19, 1
      %p42 = por %p40, %p41
      %p44 = scmp.ne.s32.totalorder %s27, %s43
      %p45 = scmp.eq.s32.totalorder %s19, 0
      %p46 = por %p44, %p45
      %s48 = sadd.s32 %s47, 1
      %p51 = scmp.eq.s32.totalorder %s13, 1
      %p52 = scmp.ne.s32.totalorder %s47, %s49
      %p53 = scmp.eq.s32.totalorder %s13, 0
      %p54 = por %p52, %p53
      %p55 = scmp.ne.s32.totalorder %s47, %s49
      %p56 = scmp.eq.s32.totalorder %s18, 1
      %p57 = por %p55, %p56
      %p58 = scmp.ne.s32.totalorder %s49, %s50
      %p59 = scmp.eq.s32.totalorder %s18, 0
      %p60 = por %p58, %p59
      %p61 = scmp.ne.s32.totalorder %s49, %s50
      %p62 = scmp.eq.s32.totalorder %s19, 1
      %p63 = por %p61, %p62
      %p65 = scmp.ne.s32.totalorder %s50, %s64
      %p66 = scmp.eq.s32.totalorder %s19, 0
      %p67 = por %p65, %p66
      %s69 = sadd.s32 %s68, 1
      %p72 = scmp.eq.s32.totalorder %s13, 1
      %p73 = scmp.ne.s32.totalorder %s68, %s70
      %p74 = scmp.eq.s32.totalorder %s13, 0
      %p75 = por %p73, %p74
      %p76 = scmp.ne.s32.totalorder %s68, %s70
      %p77 = scmp.eq.s32.totalorder %s18, 1
      %p78 = por %p76, %p77
      %p79 = scmp.ne.s32.totalorder %s70, %s71
      %p80 = scmp.eq.s32.totalorder %s18, 0
      %p81 = por %p79, %p80
      %p82 = scmp.ne.s32.totalorder %s70, %s71
      %p83 = scmp.eq.s32.totalorder %s19, 1
      %p84 = por %p82, %p83
      %p86 = scmp.ne.s32.totalorder %s71, %s85
      %p87 = scmp.eq.s32.totalorder %s19, 0
      %p88 = por %p86, %p87
      %s90 = sadd.s32 %s89, 1
      %p93 = scmp.eq.s32.totalorder %s13, 1
      %p94 = scmp.ne.s32.totalorder %s89, %s91
      %p95 = scmp.eq.s32.totalorder %s13, 0
      %p96 = por %p94, %p95
      %p97 = scmp.ne.s32.totalorder %s89, %s91
      %p98 = scmp.eq.s32.totalorder %s18, 1
      %p99 = por %p97, %p98
      %p100 = scmp.ne.s32.totalorder %s91, %s92
      %p101 = scmp.eq.s32.totalorder %s18, 0
      %p102 = por %p100, %p101
      %p103 = scmp.ne.s32.totalorder %s91, %s92
      %p104 = scmp.eq.s32.totalorder %s19, 1
      %p105 = por %p103, %p104
      %p107 = scmp.ne.s32.totalorder %s92, %s106
      %p108 = scmp.eq.s32.totalorder %s19, 0
      %p109 = por %p107, %p108
      %s110 = ssub.s32 %s13, %s20
      %p111 = scmp.eq.s32.totalorder %s110, 0
      %s113 = sadd.s32 %s112, 1
      %s114 = scalar_select %p111, %s112, %s113
      %p117 = pneg %p111
      %p118 = scmp.eq.s32.totalorder %s13, 1
      %p119 = por %p117, %p118
      %p120 = scmp.ne.s32.totalorder %s112, %s115
      %p121 = scmp.eq.s32.totalorder %s13, 0
      %p122 = por %p120, %p121
      %p123 = scmp.ne.s32.totalorder %s112, %s115
      %p124 = scmp.eq.s32.totalorder %s18, 1
      %p125 = por %p123, %p124
      %p126 = scmp.ne.s32.totalorder %s115, %s116
      %p127 = scmp.eq.s32.totalorder %s18, 0
      %p128 = por %p126, %p127
      %p129 = scmp.ne.s32.totalorder %s115, %s116
      %p130 = scmp.eq.s32.totalorder %s19, 1
      %p131 = por %p129, %p130
      %p133 = scmp.ne.s32.totalorder %s116, %s132
      %p134 = scmp.eq.s32.totalorder %s19, 0
      %p135 = por %p133, %p134
      %p136 = scmp.le.s32.totalorder 1, %s13
      %p137 = scmp.lt.s32.totalorder %s13, 3
      %p138 = pnand %p136, %p137
      %p139 = pneg %p138
      // Predicated region
      $region9: #{tpu_custom_call.1} parent=5 // pred_check
        _
      $region10: #{tpu_custom_call.1} parent=5 // pred_check_branch
        %141 = sbr.rel (%p138) target = $region12
      $region11: #{tpu_custom_call.1} parent=5 // pred_region
        %s142 = ssub.s32 %s13, 1
        // Predicated region
        $region13: #{tpu_custom_call.1} parent=11 // pred_check
          %p143 = pneg %p60
        $region14: #{tpu_custom_call.1} parent=11 // pred_check_branch
          %145 = sbr.rel (%p143) target = $region16
        $region15: #{tpu_custom_call.1} parent=11 // pred_region
          _
        $region16: #{tpu_custom_call.1} parent=11 // pred_fallthru
          _
        // Predicated region
        $region17: #{tpu_custom_call.1} parent=11 // pred_check
          %p146 = pneg %p81
        $region18: #{tpu_custom_call.1} parent=11 // pred_check_branch
          %148 = sbr.rel (%p146) target = $region20
        $region19: #{tpu_custom_call.1} parent=11 // pred_region
          _
        $region20: #{tpu_custom_call.1} parent=11 // pred_fallthru
          _
        // Predicated region
        $region21: #{tpu_custom_call.1} parent=11 // pred_check
          %p149 = pneg %p102
        $region22: #{tpu_custom_call.1} parent=11 // pred_check_branch
          %151 = sbr.rel (%p149) target = $region24
        $region23: #{tpu_custom_call.1} parent=11 // pred_region
          _
        $region24: #{tpu_custom_call.1} parent=11 // pred_fallthru
          _
      $region12: #{tpu_custom_call.1} parent=5 // pred_fallthru
        _
      %p152 = scmp.lt.s32.totalorder %s13, 2
      // Predicated region
      $region25: #{tpu_custom_call.1} parent=5 // pred_check
        %p153 = pneg %p152
      $region26: #{tpu_custom_call.1} parent=5 // pred_check_branch
        %155 = sbr.rel (%p153) target = $region28
      $region27: #{tpu_custom_call.1} parent=5 // pred_region
        // Predicated region
        $region29: #{tpu_custom_call.1} parent=27 // pred_check
          %p156 = pneg %p33
        $region30: #{tpu_custom_call.1} parent=27 // pred_check_branch
          %158 = sbr.rel (%p156) target = $region32
        $region31: #{tpu_custom_call.1} parent=27 // pred_region
          %p159 = scmp.lt.s32.totalorder %s13, 1
          %s160 = scalar_select %p159, %s13, 1
          %s161 = smul.addr %s160, 2
          %s162 = smul.addr %s161, 4
          %s163 = scalar_lea.vmem %s0, %s162
        $region32: #{tpu_custom_call.1} parent=27 // pred_fallthru
          _
      $region28: #{tpu_custom_call.1} parent=5 // pred_fallthru
        _
      %p164 = scmp.le.s32.totalorder 1, %s13
      %p165 = scmp.lt.s32.totalorder %s13, 3
      %p166 = pnand %p164, %p165
      %p167 = pneg %p166
      // Predicated region
      $region33: #{tpu_custom_call.1} parent=5 // pred_check
        _
      $region34: #{tpu_custom_call.1} parent=5 // pred_check_branch
        %169 = sbr.rel (%p166) target = $region36
      $region35: #{tpu_custom_call.1} parent=5 // pred_region
        %s170 = ssub.s32 %s13, 1
        %p171 = scmp.lt.s32.totalorder %s18, 1
        %s172 = scalar_select %p171, %s18, 1
        %s173 = smul.addr %s172, 2
        %s174 = smul.addr %s173, 4
        %s175 = scalar_lea.vmem %s0, %s174
        %p176 = pneg %p39
        %p177 = pneg %p36
        %p178 = pneg %p60
        %p179 = pneg %p57
        %p180 = pneg %p81
        %p181 = pneg %p78
        %p182 = pneg %p102
        %p183 = pneg %p99
        %p184 = pneg %p128
        %p185 = pneg %p125
        %s186 = sand.u32 %s115, 1
        %s187 = scalar_lea.sflag [#allocation3], %s186
        %s188 = sand.u32 %s115, 1
        %s189 = smul.addr %s188, 8
        %s190 = scalar_lea.vmem [#allocation2], %s189
        %p191 = scmp.lt.s32.totalorder %s18, 1
        %s192 = scalar_select %p191, %s18, 1
        %s193 = smul.addr %s192, 2
        %s194 = smul.addr %s193, 4
        %s195 = scalar_lea.vmem %s0, %s194
        %v196 = vlaneseq
        %v197 = vand.u32 %v196, 127
        %v198 = vadd.s32 %v197, 128
        %v199 = vand.u32 %v197, 15
        %v200 = vand.u32 %v198, 15
        %vm201 = vcmp.ne.s32.totalorder %v199, 0
        %vm202 = vcmp.ne.s32.totalorder %v200, 0
        %vm203 = vcmp.ne.s32.totalorder %v199, 15
        %vm204 = vcmp.ne.s32.totalorder %v200, 15
        %vm205 = vcmp.ge.s32.totalorder %v197, 16
        %vm206 = vcmp.ge.s32.totalorder %v198, 16
        %vm207 = vcmp.lt.s32.totalorder %v197, 240
        %vm208 = vcmp.lt.s32.totalorder %v198, 240
        %vm209 = vmand %vm205, %vm201
        %vm210 = vmand %vm206, %vm202
        %vm211 = vmand %vm205, %vm203
        %vm212 = vmand %vm206, %vm204
        %vm213 = vmand %vm207, %vm201
        %vm214 = vmand %vm208, %vm202
        %vm215 = vmand %vm207, %vm203
        %vm216 = vmand %vm208, %vm204
        %v217 = vld [vmem:[%s195] sm:$0xff]
        %v218 = vmax.f32 %v217, 0.0
        %v220 = vcombine.high %v218, %v218
        %222 = vrot.lane.b32.xlu0 %v218, 17
        %v223 = vpop.permute.xlu0 %222
        %224 = vrot.lane.b32.xlu0 %v220, 17
        %v225 = vpop.permute.xlu0 %224
        %vm226 = vcmp.lt.s32.totalorder %v197, 17
        %v227 = vsel %vm226, %v223, %v225
        %v228 = vsel %vm226, %v225, %v223
        %v229 = vsel %vm209, 1, 0
        %v230 = vsel %vm210, 1, 0
        %vm231 = vcmp.eq.s32.totalorder %v229, 1
        %vm232 = vcmp.eq.s32.totalorder %v230, 1
        %v233 = vsel %vm231, %v228, 0.0
        %v234 = vsel %vm232, %v227, 0.0
        %v235 = vld [vmem:[%s1] sm:$0xf]
        %236 = vrot.lane.b32.xlu0 %v218, 16
        %v237 = vpop.permute.xlu0 %236
        %238 = vrot.lane.b32.xlu0 %v220, 16
        %v239 = vpop.permute.xlu0 %238
        %vm240 = vcmp.lt.s32.totalorder %v197, 16
        %v241 = vsel %vm240, %v237, %v239
        %v242 = vsel %vm240, %v239, %v237
        %v243 = vsel %vm205, 1, 0
        %v244 = vsel %vm206, 1, 0
        %vm245 = vcmp.eq.s32.totalorder %v243, 1
        %vm246 = vcmp.eq.s32.totalorder %v244, 1
        %v247 = vsel %vm245, %v242, 0.0
        %v248 = vsel %vm246, %v241, 0.0
        %s249 = scalar_lea.vmem %s1, 4
        %v250 = vld [vmem:[%s249] sm:$0xf]
        %vm251 = vcmask 31744
        %v253 = vsel %vm251, %v250, 0
        %vm255 = vcmask 1043456
        %v257 = vsel %vm255, %v247, 0
        %v260 = vsel %vm255, %v248, 0
        %262 = vmatprep.subr.mxu0 %v260
        %263 = vmatpush1.msra.mxu0 %v257
        %264 = vmatprep.subr.mxu0 0.0
        %265 = vmatpush1.msra.mxu0 0.0
        %266 = vmatprep.subr.mxu0 0.0
        %267 = vmatpush1.msra.mxu0 0.0
        %268 = vmatprep.subr.mxu0 0.0
        %269 = vmatpush1.msra.mxu0 0.0
        %270 = vmatprep.subr.mxu0 0.0
        %271 = vmatpush1.msra.mxu0 0.0
        %272 = vmatprep.subr.mxu0 0.0
        %273 = vmatpush1.msra.mxu0 0.0
        %274 = vmatprep.subr.mxu0 0.0
        %275 = vmatpush1.msra.mxu0 0.0
        %276 = vmatprep.subr.mxu0 0.0
        %277 = vmatpush1.msra.mxu0 0.0
        %278 = vmatprep.subr.mxu0 0.0
        %279 = vmatpush1.msra.mxu0 0.0
        %280 = vmatprep.subr.mxu0 0.0
        %281 = vmatpush1.msra.mxu0 0.0
        %282 = vmatprep.subr.mxu0 0.0
        %283 = vmatpush1.msra.mxu0 0.0
        %284 = vmatprep.subr.mxu0 0.0
        %285 = vmatpush1.msra.mxu0 0.0
        %286 = vmatprep.subr.mxu0 0.0
        %287 = vmatpush1.msra.mxu0 0.0
        %288 = vmatprep.subr.mxu0 0.0
        %289 = vmatpush1.msra.mxu0 0.0
        %290 = vmatprep.subr.mxu0 0.0
        %291 = vmatpush1.msra.mxu0 0.0
        %292 = vmatprep.subr.mxu0 0.0
        %293 = vmatpush1.msra.mxu0 0.0
        %294 = vmatprep.subr.mxu0 0.0
        %295 = vmatpush1.msra.mxu0 0.0
        %296 = vmatprep.subr.mxu0 0.0
        %297 = vmatpush1.msra.mxu0 0.0
        %298 = vmatprep.subr.mxu0 0.0
        %299 = vmatpush1.msra.mxu0 0.0
        %300 = vmatprep.subr.mxu0 0.0
        %301 = vmatpush1.msra.mxu0 0.0
        %302 = vmatprep.subr.mxu0 0.0
        %303 = vmatpush1.msra.mxu0 0.0
        %304 = vmatprep.subr.mxu0 0.0
        %305 = vmatpush1.msra.mxu0 0.0
        %306 = vmatprep.subr.mxu0 0.0
        %307 = vmatpush1.msra.mxu0 0.0
        %308 = vmatprep.subr.mxu0 0.0
        %309 = vmatpush1.msra.mxu0 0.0
        %310 = vmatprep.subr.mxu0 0.0
        %311 = vmatpush1.msra.mxu0 0.0
        %312 = vmatprep.subr.mxu0 0.0
        %313 = vmatpush1.msra.mxu0 0.0
        %314 = vmatprep.subr.mxu0 0.0
        %315 = vmatpush1.msra.mxu0 0.0
        %316 = vmatprep.subr.mxu0 0.0
        %317 = vmatpush1.msra.mxu0 0.0
        %318 = vmatprep.subr.mxu0 0.0
        %319 = vmatpush1.msra.mxu0 0.0
        %320 = vmatprep.subr.mxu0 0.0
        %321 = vmatpush1.msra.mxu0 0.0
        %322 = vmatprep.subr.mxu0 0.0
        %323 = vmatpush1.msra.mxu0 0.0
        %324 = vmatprep.subr.mxu0 0.0
        %325 = vmatpush1.msra.mxu0 0.0
        %326 = vmatprep.mubr.f32.mxu0 0.0
        %327 = vmatmul.mubr.f32.gmra.mrb[0].mxu0 %v253
        %v328 = vpop.f32.mrb[0].mxu0
        %v329 = vadd.f32 0.0, %v328
        %v330 = vpop.f32.mrb[0].mxu0
        %v331 = vadd.f32 0.0, %v330
        %332 = vdwg.mxu0
        %v334 = vsel %vm251, %v235, 0
        %v337 = vsel %vm255, %v233, 0
        %v340 = vsel %vm255, %v234, 0
        %342 = vmatprep.subr.mxu0 %v340
        %343 = vmatpush1.msra.mxu0 %v337
        %344 = vmatprep.subr.mxu0 0.0
        %345 = vmatpush1.msra.mxu0 0.0
        %346 = vmatprep.subr.mxu0 0.0
        %347 = vmatpush1.msra.mxu0 0.0
        %348 = vmatprep.subr.mxu0 0.0
        %349 = vmatpush1.msra.mxu0 0.0
        %350 = vmatprep.subr.mxu0 0.0
        %351 = vmatpush1.msra.mxu0 0.0
        %352 = vmatprep.subr.mxu0 0.0
        %353 = vmatpush1.msra.mxu0 0.0
        %354 = vmatprep.subr.mxu0 0.0
        %355 = vmatpush1.msra.mxu0 0.0
        %356 = vmatprep.subr.mxu0 0.0
        %357 = vmatpush1.msra.mxu0 0.0
        %358 = vmatprep.subr.mxu0 0.0
        %359 = vmatpush1.msra.mxu0 0.0
        %360 = vmatprep.subr.mxu0 0.0
        %361 = vmatpush1.msra.mxu0 0.0
        %362 = vmatprep.subr.mxu0 0.0
        %363 = vmatpush1.msra.mxu0 0.0
        %364 = vmatprep.subr.mxu0 0.0
        %365 = vmatpush1.msra.mxu0 0.0
        %366 = vmatprep.subr.mxu0 0.0
        %367 = vmatpush1.msra.mxu0 0.0
        %368 = vmatprep.subr.mxu0 0.0
        %369 = vmatpush1.msra.mxu0 0.0
        %370 = vmatprep.subr.mxu0 0.0
        %371 = vmatpush1.msra.mxu0 0.0
        %372 = vmatprep.subr.mxu0 0.0
        %373 = vmatpush1.msra.mxu0 0.0
        %374 = vmatprep.subr.mxu0 0.0
        %375 = vmatpush1.msra.mxu0 0.0
        %376 = vmatprep.subr.mxu0 0.0
        %377 = vmatpush1.msra.mxu0 0.0
        %378 = vmatprep.subr.mxu0 0.0
        %379 = vmatpush1.msra.mxu0 0.0
        %380 = vmatprep.subr.mxu0 0.0
        %381 = vmatpush1.msra.mxu0 0.0
        %382 = vmatprep.subr.mxu0 0.0
        %383 = vmatpush1.msra.mxu0 0.0
        %384 = vmatprep.subr.mxu0 0.0
        %385 = vmatpush1.msra.mxu0 0.0
        %386 = vmatprep.subr.mxu0 0.0
        %387 = vmatpush1.msra.mxu0 0.0
        %388 = vmatprep.subr.mxu0 0.0
        %389 = vmatpush1.msra.mxu0 0.0
        %390 = vmatprep.subr.mxu0 0.0
        %391 = vmatpush1.msra.mxu0 0.0
        %392 = vmatprep.subr.mxu0 0.0
        %393 = vmatpush1.msra.mxu0 0.0
        %394 = vmatprep.subr.mxu0 0.0
        %395 = vmatpush1.msra.mxu0 0.0
        %396 = vmatprep.subr.mxu0 0.0
        %397 = vmatpush1.msra.mxu0 0.0
        %398 = vmatprep.subr.mxu0 0.0
        %399 = vmatpush1.msra.mxu0 0.0
        %400 = vmatprep.subr.mxu0 0.0
        %401 = vmatpush1.msra.mxu0 0.0
        %402 = vmatprep.subr.mxu0 0.0
        %403 = vmatpush1.msra.mxu0 0.0
        %404 = vmatprep.subr.mxu0 0.0
        %405 = vmatpush1.msra.mxu0 0.0
        %406 = vmatprep.mubr.f32.mxu0 0.0
        %407 = vmatmul.mubr.f32.gmra.mrb[0].mxu0 %v334
        %v408 = vpop.f32.mrb[0].mxu0
        %v409 = vadd.f32 %v329, %v408
        %v410 = vpop.f32.mrb[0].mxu0
        %v411 = vadd.f32 %v331, %v410
        %412 = vdwg.mxu0
        %413 = vrot.lane.b32.xlu0 %v218, 15
        %v414 = vpop.permute.xlu0 %413
        %415 = vrot.lane.b32.xlu0 %v220, 15
        %v416 = vpop.permute.xlu0 %415
        %vm417 = vcmp.lt.s32.totalorder %v197, 15
        %v418 = vsel %vm417, %v414, %v416
        %v419 = vsel %vm417, %v416, %v414
        %v420 = vsel %vm211, 1, 0
        %v421 = vsel %vm212, 1, 0
        %vm422 = vcmp.eq.s32.totalorder %v420, 1
        %vm423 = vcmp.eq.s32.totalorder %v421, 1
        %v424 = vsel %vm422, %v419, 0.0
        %v425 = vsel %vm423, %v418, 0.0
        %s426 = scalar_lea.vmem %s1, 8
        %v427 = vld [vmem:[%s426] sm:$0xf]
        %v429 = vsel %vm251, %v427, 0
        %v432 = vsel %vm255, %v424, 0
        %v435 = vsel %vm255, %v425, 0
        %437 = vmatprep.subr.mxu0 %v435
        %438 = vmatpush1.msra.mxu0 %v432
        %439 = vmatprep.subr.mxu0 0.0
        %440 = vmatpush1.msra.mxu0 0.0
        %441 = vmatprep.subr.mxu0 0.0
        %442 = vmatpush1.msra.mxu0 0.0
        %443 = vmatprep.subr.mxu0 0.0
        %444 = vmatpush1.msra.mxu0 0.0
        %445 = vmatprep.subr.mxu0 0.0
        %446 = vmatpush1.msra.mxu0 0.0
        %447 = vmatprep.subr.mxu0 0.0
        %448 = vmatpush1.msra.mxu0 0.0
        %449 = vmatprep.subr.mxu0 0.0
        %450 = vmatpush1.msra.mxu0 0.0
        %451 = vmatprep.subr.mxu0 0.0
        %452 = vmatpush1.msra.mxu0 0.0
        %453 = vmatprep.subr.mxu0 0.0
        %454 = vmatpush1.msra.mxu0 0.0
        %455 = vmatprep.subr.mxu0 0.0
        %456 = vmatpush1.msra.mxu0 0.0
        %457 = vmatprep.subr.mxu0 0.0
        %458 = vmatpush1.msra.mxu0 0.0
        %459 = vmatprep.subr.mxu0 0.0
        %460 = vmatpush1.msra.mxu0 0.0
        %461 = vmatprep.subr.mxu0 0.0
        %462 = vmatpush1.msra.mxu0 0.0
        %463 = vmatprep.subr.mxu0 0.0
        %464 = vmatpush1.msra.mxu0 0.0
        %465 = vmatprep.subr.mxu0 0.0
        %466 = vmatpush1.msra.mxu0 0.0
        %467 = vmatprep.subr.mxu0 0.0
        %468 = vmatpush1.msra.mxu0 0.0
        %469 = vmatprep.subr.mxu0 0.0
        %470 = vmatpush1.msra.mxu0 0.0
        %471 = vmatprep.subr.mxu0 0.0
        %472 = vmatpush1.msra.mxu0 0.0
        %473 = vmatprep.subr.mxu0 0.0
        %474 = vmatpush1.msra.mxu0 0.0
        %475 = vmatprep.subr.mxu0 0.0
        %476 = vmatpush1.msra.mxu0 0.0
        %477 = vmatprep.subr.mxu0 0.0
        %478 = vmatpush1.msra.mxu0 0.0
        %479 = vmatprep.subr.mxu0 0.0
        %480 = vmatpush1.msra.mxu0 0.0
        %481 = vmatprep.subr.mxu0 0.0
        %482 = vmatpush1.msra.mxu0 0.0
        %483 = vmatprep.subr.mxu0 0.0
        %484 = vmatpush1.msra.mxu0 0.0
        %485 = vmatprep.subr.mxu0 0.0
        %486 = vmatpush1.msra.mxu0 0.0
        %487 = vmatprep.subr.mxu0 0.0
        %488 = vmatpush1.msra.mxu0 0.0
        %489 = vmatprep.subr.mxu0 0.0
        %490 = vmatpush1.msra.mxu0 0.0
        %491 = vmatprep.subr.mxu0 0.0
        %492 = vmatpush1.msra.mxu0 0.0
        %493 = vmatprep.subr.mxu0 0.0
        %494 = vmatpush1.msra.mxu0 0.0
        %495 = vmatprep.subr.mxu0 0.0
        %496 = vmatpush1.msra.mxu0 0.0
        %497 = vmatprep.subr.mxu0 0.0
        %498 = vmatpush1.msra.mxu0 0.0
        %499 = vmatprep.subr.mxu0 0.0
        %500 = vmatpush1.msra.mxu0 0.0
        %501 = vmatprep.mubr.f32.mxu0 0.0
        %502 = vmatmul.mubr.f32.gmra.mrb[0].mxu0 %v429
        %v503 = vpop.f32.mrb[0].mxu0
        %v504 = vadd.f32 0.0, %v503
        %v505 = vpop.f32.mrb[0].mxu0
        %v506 = vadd.f32 0.0, %v505
        %507 = vdwg.mxu0
        %v508 = vadd.f32 %v409, %v504
        %v509 = vadd.f32 %v411, %v506
        %510 = vrot.lane.b32.xlu0 %v218, 1
        %v511 = vpop.permute.xlu0 %510
        %512 = vrot.lane.b32.xlu0 %v220, 1
        %v513 = vpop.permute.xlu0 %512
        %vm514 = vcmp.lt.s32.totalorder %v197, 1
        %v515 = vsel %vm514, %v511, %v513
        %v516 = vsel %vm514, %v513, %v511
        %v517 = vsel %vm201, 1, 0
        %v518 = vsel %vm202, 1, 0
        %vm519 = vcmp.eq.s32.totalorder %v517, 1
        %vm520 = vcmp.eq.s32.totalorder %v518, 1
        %v521 = vsel %vm519, %v516, 0.0
        %v522 = vsel %vm520, %v515, 0.0
        %s523 = scalar_lea.vmem %s1, 12
        %v524 = vld [vmem:[%s523] sm:$0xf]
        %v526 = vsel %vm251, %v524, 0
        %v529 = vsel %vm255, %v521, 0
        %v532 = vsel %vm255, %v522, 0
        %534 = vmatprep.subr.mxu0 %v532
        %535 = vmatpush1.msra.mxu0 %v529
        %536 = vmatprep.subr.mxu0 0.0
        %537 = vmatpush1.msra.mxu0 0.0
        %538 = vmatprep.subr.mxu0 0.0
        %539 = vmatpush1.msra.mxu0 0.0
        %540 = vmatprep.subr.mxu0 0.0
        %541 = vmatpush1.msra.mxu0 0.0
        %542 = vmatprep.subr.mxu0 0.0
        %543 = vmatpush1.msra.mxu0 0.0
        %544 = vmatprep.subr.mxu0 0.0
        %545 = vmatpush1.msra.mxu0 0.0
        %546 = vmatprep.subr.mxu0 0.0
        %547 = vmatpush1.msra.mxu0 0.0
        %548 = vmatprep.subr.mxu0 0.0
        %549 = vmatpush1.msra.mxu0 0.0
        %550 = vmatprep.subr.mxu0 0.0
        %551 = vmatpush1.msra.mxu0 0.0
        %552 = vmatprep.subr.mxu0 0.0
        %553 = vmatpush1.msra.mxu0 0.0
        %554 = vmatprep.subr.mxu0 0.0
        %555 = vmatpush1.msra.mxu0 0.0
        %556 = vmatprep.subr.mxu0 0.0
        %557 = vmatpush1.msra.mxu0 0.0
        %558 = vmatprep.subr.mxu0 0.0
        %559 = vmatpush1.msra.mxu0 0.0
        %560 = vmatprep.subr.mxu0 0.0
        %561 = vmatpush1.msra.mxu0 0.0
        %562 = vmatprep.subr.mxu0 0.0
        %563 = vmatpush1.msra.mxu0 0.0
        %564 = vmatprep.subr.mxu0 0.0
        %565 = vmatpush1.msra.mxu0 0.0
        %566 = vmatprep.subr.mxu0 0.0
        %567 = vmatpush1.msra.mxu0 0.0
        %568 = vmatprep.subr.mxu0 0.0
        %569 = vmatpush1.msra.mxu0 0.0
        %570 = vmatprep.subr.mxu0 0.0
        %571 = vmatpush1.msra.mxu0 0.0
        %572 = vmatprep.subr.mxu0 0.0
        %573 = vmatpush1.msra.mxu0 0.0
        %574 = vmatprep.subr.mxu0 0.0
        %575 = vmatpush1.msra.mxu0 0.0
        %576 = vmatprep.subr.mxu0 0.0
        %577 = vmatpush1.msra.mxu0 0.0
        %578 = vmatprep.subr.mxu0 0.0
        %579 = vmatpush1.msra.mxu0 0.0
        %580 = vmatprep.subr.mxu0 0.0
        %581 = vmatpush1.msra.mxu0 0.0
        %582 = vmatprep.subr.mxu0 0.0
        %583 = vmatpush1.msra.mxu0 0.0
        %584 = vmatprep.subr.mxu0 0.0
        %585 = vmatpush1.msra.mxu0 0.0
        %586 = vmatprep.subr.mxu0 0.0
        %587 = vmatpush1.msra.mxu0 0.0
        %588 = vmatprep.subr.mxu0 0.0
        %589 = vmatpush1.msra.mxu0 0.0
        %590 = vmatprep.subr.mxu0 0.0
        %591 = vmatpush1.msra.mxu0 0.0
        %592 = vmatprep.subr.mxu0 0.0
        %593 = vmatpush1.msra.mxu0 0.0
        %594 = vmatprep.subr.mxu0 0.0
        %595 = vmatpush1.msra.mxu0 0.0
        %596 = vmatprep.subr.mxu0 0.0
        %597 = vmatpush1.msra.mxu0 0.0
        %598 = vmatprep.mubr.f32.mxu0 0.0
        %599 = vmatmul.mubr.f32.gmra.mrb[0].mxu0 %v526
        %v600 = vpop.f32.mrb[0].mxu0
        %v601 = vadd.f32 0.0, %v600
        %v602 = vpop.f32.mrb[0].mxu0
        %v603 = vadd.f32 0.0, %v602
        %604 = vdwg.mxu0
        %v605 = vadd.f32 %v508, %v601
        %v606 = vadd.f32 %v509, %v603
        %s607 = scalar_lea.vmem %s1, 16
        %v608 = vld [vmem:[%s607] sm:$0xf]
        %v610 = vsel %vm251, %v608, 0
        %v612 = vsel %vm255, %v218, 0
        %v614 = vsel %vm255, %v220, 0
        %616 = vmatprep.subr.mxu0 %v614
        %617 = vmatpush1.msra.mxu0 %v612
        %618 = vmatprep.subr.mxu0 0.0
        %619 = vmatpush1.msra.mxu0 0.0
        %620 = vmatprep.subr.mxu0 0.0
        %621 = vmatpush1.msra.mxu0 0.0
        %622 = vmatprep.subr.mxu0 0.0
        %623 = vmatpush1.msra.mxu0 0.0
        %624 = vmatprep.subr.mxu0 0.0
        %625 = vmatpush1.msra.mxu0 0.0
        %626 = vmatprep.subr.mxu0 0.0
        %627 = vmatpush1.msra.mxu0 0.0
        %628 = vmatprep.subr.mxu0 0.0
        %629 = vmatpush1.msra.mxu0 0.0
        %630 = vmatprep.subr.mxu0 0.0
        %631 = vmatpush1.msra.mxu0 0.0
        %632 = vmatprep.subr.mxu0 0.0
        %633 = vmatpush1.msra.mxu0 0.0
        %634 = vmatprep.subr.mxu0 0.0
        %635 = vmatpush1.msra.mxu0 0.0
        %636 = vmatprep.subr.mxu0 0.0
        %637 = vmatpush1.msra.mxu0 0.0
        %638 = vmatprep.subr.mxu0 0.0
        %639 = vmatpush1.msra.mxu0 0.0
        %640 = vmatprep.subr.mxu0 0.0
        %641 = vmatpush1.msra.mxu0 0.0
        %642 = vmatprep.subr.mxu0 0.0
        %643 = vmatpush1.msra.mxu0 0.0
        %644 = vmatprep.subr.mxu0 0.0
        %645 = vmatpush1.msra.mxu0 0.0
        %646 = vmatprep.subr.mxu0 0.0
        %647 = vmatpush1.msra.mxu0 0.0
        %648 = vmatprep.subr.mxu0 0.0
        %649 = vmatpush1.msra.mxu0 0.0
        %650 = vmatprep.subr.mxu0 0.0
        %651 = vmatpush1.msra.mxu0 0.0
        %652 = vmatprep.subr.mxu0 0.0
        %653 = vmatpush1.msra.mxu0 0.0
        %654 = vmatprep.subr.mxu0 0.0
        %655 = vmatpush1.msra.mxu0 0.0
        %656 = vmatprep.subr.mxu0 0.0
        %657 = vmatpush1.msra.mxu0 0.0
        %658 = vmatprep.subr.mxu0 0.0
        %659 = vmatpush1.msra.mxu0 0.0
        %660 = vmatprep.subr.mxu0 0.0
        %661 = vmatpush1.msra.mxu0 0.0
        %662 = vmatprep.subr.mxu0 0.0
        %663 = vmatpush1.msra.mxu0 0.0
        %664 = vmatprep.subr.mxu0 0.0
        %665 = vmatpush1.msra.mxu0 0.0
        %666 = vmatprep.subr.mxu0 0.0
        %667 = vmatpush1.msra.mxu0 0.0
        %668 = vmatprep.subr.mxu0 0.0
        %669 = vmatpush1.msra.mxu0 0.0
        %670 = vmatprep.subr.mxu0 0.0
        %671 = vmatpush1.msra.mxu0 0.0
        %672 = vmatprep.subr.mxu0 0.0
        %673 = vmatpush1.msra.mxu0 0.0
        %674 = vmatprep.subr.mxu0 0.0
        %675 = vmatpush1.msra.mxu0 0.0
        %676 = vmatprep.subr.mxu0 0.0
        %677 = vmatpush1.msra.mxu0 0.0
        %678 = vmatprep.subr.mxu0 0.0
        %679 = vmatpush1.msra.mxu0 0.0
        %680 = vmatprep.mubr.f32.mxu0 0.0
        %681 = vmatmul.mubr.f32.gmra.mrb[0].mxu0 %v610
        %v682 = vpop.f32.mrb[0].mxu0
        %v683 = vadd.f32 0.0, %v682
        %v684 = vpop.f32.mrb[0].mxu0
        %v685 = vadd.f32 0.0, %v684
        %686 = vdwg.mxu0
        %v687 = vadd.f32 %v605, %v683
        %v688 = vadd.f32 %v606, %v685
        %689 = vrot.lane.b32.xlu0 %v218, 127
        %v690 = vpop.permute.xlu0 %689
        %691 = vrot.lane.b32.xlu0 %v220, 127
        %v692 = vpop.permute.xlu0 %691
        %vm693 = vcmp.lt.s32.totalorder %v197, 127
        %v694 = vsel %vm693, %v690, %v692
        %v695 = vsel %vm693, %v692, %v690
        %v696 = vsel %vm203, 1, 0
        %v697 = vsel %vm204, 1, 0
        %vm698 = vcmp.eq.s32.totalorder %v696, 1
        %vm699 = vcmp.eq.s32.totalorder %v697, 1
        %v700 = vsel %vm698, %v694, 0.0
        %v701 = vsel %vm699, %v695, 0.0
        %s702 = scalar_lea.vmem %s1, 20
        %v703 = vld [vmem:[%s702] sm:$0xf]
        %v705 = vsel %vm251, %v703, 0
        %v708 = vsel %vm255, %v700, 0
        %v711 = vsel %vm255, %v701, 0
        %713 = vmatprep.subr.mxu0 %v711
        %714 = vmatpush1.msra.mxu0 %v708
        %715 = vmatprep.subr.mxu0 0.0
        %716 = vmatpush1.msra.mxu0 0.0
        %717 = vmatprep.subr.mxu0 0.0
        %718 = vmatpush1.msra.mxu0 0.0
        %719 = vmatprep.subr.mxu0 0.0
        %720 = vmatpush1.msra.mxu0 0.0
        %721 = vmatprep.subr.mxu0 0.0
        %722 = vmatpush1.msra.mxu0 0.0
        %723 = vmatprep.subr.mxu0 0.0
        %724 = vmatpush1.msra.mxu0 0.0
        %725 = vmatprep.subr.mxu0 0.0
        %726 = vmatpush1.msra.mxu0 0.0
        %727 = vmatprep.subr.mxu0 0.0
        %728 = vmatpush1.msra.mxu0 0.0
        %729 = vmatprep.subr.mxu0 0.0
        %730 = vmatpush1.msra.mxu0 0.0
        %731 = vmatprep.subr.mxu0 0.0
        %732 = vmatpush1.msra.mxu0 0.0
        %733 = vmatprep.subr.mxu0 0.0
        %734 = vmatpush1.msra.mxu0 0.0
        %735 = vmatprep.subr.mxu0 0.0
        %736 = vmatpush1.msra.mxu0 0.0
        %737 = vmatprep.subr.mxu0 0.0
        %738 = vmatpush1.msra.mxu0 0.0
        %739 = vmatprep.subr.mxu0 0.0
        %740 = vmatpush1.msra.mxu0 0.0
        %741 = vmatprep.subr.mxu0 0.0
        %742 = vmatpush1.msra.mxu0 0.0
        %743 = vmatprep.subr.mxu0 0.0
        %744 = vmatpush1.msra.mxu0 0.0
        %745 = vmatprep.subr.mxu0 0.0
        %746 = vmatpush1.msra.mxu0 0.0
        %747 = vmatprep.subr.mxu0 0.0
        %748 = vmatpush1.msra.mxu0 0.0
        %749 = vmatprep.subr.mxu0 0.0
        %750 = vmatpush1.msra.mxu0 0.0
        %751 = vmatprep.subr.mxu0 0.0
        %752 = vmatpush1.msra.mxu0 0.0
        %753 = vmatprep.subr.mxu0 0.0
        %754 = vmatpush1.msra.mxu0 0.0
        %755 = vmatprep.subr.mxu0 0.0
        %756 = vmatpush1.msra.mxu0 0.0
        %757 = vmatprep.subr.mxu0 0.0
        %758 = vmatpush1.msra.mxu0 0.0
        %759 = vmatprep.subr.mxu0 0.0
        %760 = vmatpush1.msra.mxu0 0.0
        %761 = vmatprep.subr.mxu0 0.0
        %762 = vmatpush1.msra.mxu0 0.0
        %763 = vmatprep.subr.mxu0 0.0
        %764 = vmatpush1.msra.mxu0 0.0
        %765 = vmatprep.subr.mxu0 0.0
        %766 = vmatpush1.msra.mxu0 0.0
        %767 = vmatprep.subr.mxu0 0.0
        %768 = vmatpush1.msra.mxu0 0.0
        %769 = vmatprep.subr.mxu0 0.0
        %770 = vmatpush1.msra.mxu0 0.0
        %771 = vmatprep.subr.mxu0 0.0
        %772 = vmatpush1.msra.mxu0 0.0
        %773 = vmatprep.subr.mxu0 0.0
        %774 = vmatpush1.msra.mxu0 0.0
        %775 = vmatprep.subr.mxu0 0.0
        %776 = vmatpush1.msra.mxu0 0.0
        %777 = vmatprep.mubr.f32.mxu0 0.0
        %778 = vmatmul.mubr.f32.gmra.mrb[0].mxu0 %v705
        %v779 = vpop.f32.mrb[0].mxu0
        %v780 = vadd.f32 0.0, %v779
        %v781 = vpop.f32.mrb[0].mxu0
        %v782 = vadd.f32 0.0, %v781
        %783 = vdwg.mxu0
        %v784 = vadd.f32 %v687, %v780
        %v785 = vadd.f32 %v688, %v782
        %786 = vrot.lane.b32.xlu0 %v218, 113
        %v787 = vpop.permute.xlu0 %786
        %788 = vrot.lane.b32.xlu0 %v220, 113
        %v789 = vpop.permute.xlu0 %788
        %vm790 = vcmp.lt.s32.totalorder %v197, 113
        %v791 = vsel %vm790, %v787, %v789
        %v792 = vsel %vm790, %v789, %v787
        %v793 = vsel %vm213, 1, 0
        %v794 = vsel %vm214, 1, 0
        %vm795 = vcmp.eq.s32.totalorder %v793, 1
        %vm796 = vcmp.eq.s32.totalorder %v794, 1
        %v797 = vsel %vm795, %v791, 0.0
        %v798 = vsel %vm796, %v792, 0.0
        %s799 = scalar_lea.vmem %s1, 24
        %v800 = vld [vmem:[%s799] sm:$0xf]
        %v802 = vsel %vm251, %v800, 0
        %v805 = vsel %vm255, %v797, 0
        %v808 = vsel %vm255, %v798, 0
        %810 = vmatprep.subr.mxu0 %v808
        %811 = vmatpush1.msra.mxu0 %v805
        %812 = vmatprep.subr.mxu0 0.0
        %813 = vmatpush1.msra.mxu0 0.0
        %814 = vmatprep.subr.mxu0 0.0
        %815 = vmatpush1.msra.mxu0 0.0
        %816 = vmatprep.subr.mxu0 0.0
        %817 = vmatpush1.msra.mxu0 0.0
        %818 = vmatprep.subr.mxu0 0.0
        %819 = vmatpush1.msra.mxu0 0.0
        %820 = vmatprep.subr.mxu0 0.0
        %821 = vmatpush1.msra.mxu0 0.0
        %822 = vmatprep.subr.mxu0 0.0
        %823 = vmatpush1.msra.mxu0 0.0
        %824 = vmatprep.subr.mxu0 0.0
        %825 = vmatpush1.msra.mxu0 0.0
        %826 = vmatprep.subr.mxu0 0.0
        %827 = vmatpush1.msra.mxu0 0.0
        %828 = vmatprep.subr.mxu0 0.0
        %829 = vmatpush1.msra.mxu0 0.0
        %830 = vmatprep.subr.mxu0 0.0
        %831 = vmatpush1.msra.mxu0 0.0
        %832 = vmatprep.subr.mxu0 0.0
        %833 = vmatpush1.msra.mxu0 0.0
        %834 = vmatprep.subr.mxu0 0.0
        %835 = vmatpush1.msra.mxu0 0.0
        %836 = vmatprep.subr.mxu0 0.0
        %837 = vmatpush1.msra.mxu0 0.0
        %838 = vmatprep.subr.mxu0 0.0
        %839 = vmatpush1.msra.mxu0 0.0
        %840 = vmatprep.subr.mxu0 0.0
        %841 = vmatpush1.msra.mxu0 0.0
        %842 = vmatprep.subr.mxu0 0.0
        %843 = vmatpush1.msra.mxu0 0.0
        %844 = vmatprep.subr.mxu0 0.0
        %845 = vmatpush1.msra.mxu0 0.0
        %846 = vmatprep.subr.mxu0 0.0
        %847 = vmatpush1.msra.mxu0 0.0
        %848 = vmatprep.subr.mxu0 0.0
        %849 = vmatpush1.msra.mxu0 0.0
        %850 = vmatprep.subr.mxu0 0.0
        %851 = vmatpush1.msra.mxu0 0.0
        %852 = vmatprep.subr.mxu0 0.0
        %853 = vmatpush1.msra.mxu0 0.0
        %854 = vmatprep.subr.mxu0 0.0
        %855 = vmatpush1.msra.mxu0 0.0
        %856 = vmatprep.subr.mxu0 0.0
        %857 = vmatpush1.msra.mxu0 0.0
        %858 = vmatprep.subr.mxu0 0.0
        %859 = vmatpush1.msra.mxu0 0.0
        %860 = vmatprep.subr.mxu0 0.0
        %861 = vmatpush1.msra.mxu0 0.0
        %862 = vmatprep.subr.mxu0 0.0
        %863 = vmatpush1.msra.mxu0 0.0
        %864 = vmatprep.subr.mxu0 0.0
        %865 = vmatpush1.msra.mxu0 0.0
        %866 = vmatprep.subr.mxu0 0.0
        %867 = vmatpush1.msra.mxu0 0.0
        %868 = vmatprep.subr.mxu0 0.0
        %869 = vmatpush1.msra.mxu0 0.0
        %870 = vmatprep.subr.mxu0 0.0
        %871 = vmatpush1.msra.mxu0 0.0
        %872 = vmatprep.subr.mxu0 0.0
        %873 = vmatpush1.msra.mxu0 0.0
        %874 = vmatprep.mubr.f32.mxu0 0.0
        %875 = vmatmul.mubr.f32.gmra.mrb[0].mxu0 %v802
        %v876 = vpop.f32.mrb[0].mxu0
        %v877 = vadd.f32 0.0, %v876
        %v878 = vpop.f32.mrb[0].mxu0
        %v879 = vadd.f32 0.0, %v878
        %880 = vdwg.mxu0
        %v881 = vadd.f32 %v784, %v877
        %v882 = vadd.f32 %v785, %v879
        %883 = vrot.lane.b32.xlu0 %v218, 112
        %v884 = vpop.permute.xlu0 %883
        %885 = vrot.lane.b32.xlu0 %v220, 112
        %v886 = vpop.permute.xlu0 %885
        %vm887 = vcmp.lt.s32.totalorder %v197, 112
        %v888 = vsel %vm887, %v884, %v886
        %v889 = vsel %vm887, %v886, %v884
        %v890 = vsel %vm207, 1, 0
        %v891 = vsel %vm208, 1, 0
        %vm892 = vcmp.eq.s32.totalorder %v890, 1
        %vm893 = vcmp.eq.s32.totalorder %v891, 1
        %v894 = vsel %vm892, %v888, 0.0
        %v895 = vsel %vm893, %v889, 0.0
        %s896 = scalar_lea.vmem %s1, 28
        %v897 = vld [vmem:[%s896] sm:$0xf]
        %v899 = vsel %vm251, %v897, 0
        %v902 = vsel %vm255, %v894, 0
        %v905 = vsel %vm255, %v895, 0
        %907 = vmatprep.subr.mxu0 %v905
        %908 = vmatpush1.msra.mxu0 %v902
        %909 = vmatprep.subr.mxu0 0.0
        %910 = vmatpush1.msra.mxu0 0.0
        %911 = vmatprep.subr.mxu0 0.0
        %912 = vmatpush1.msra.mxu0 0.0
        %913 = vmatprep.subr.mxu0 0.0
        %914 = vmatpush1.msra.mxu0 0.0
        %915 = vmatprep.subr.mxu0 0.0
        %916 = vmatpush1.msra.mxu0 0.0
        %917 = vmatprep.subr.mxu0 0.0
        %918 = vmatpush1.msra.mxu0 0.0
        %919 = vmatprep.subr.mxu0 0.0
        %920 = vmatpush1.msra.mxu0 0.0
        %921 = vmatprep.subr.mxu0 0.0
        %922 = vmatpush1.msra.mxu0 0.0
        %923 = vmatprep.subr.mxu0 0.0
        %924 = vmatpush1.msra.mxu0 0.0
        %925 = vmatprep.subr.mxu0 0.0
        %926 = vmatpush1.msra.mxu0 0.0
        %927 = vmatprep.subr.mxu0 0.0
        %928 = vmatpush1.msra.mxu0 0.0
        %929 = vmatprep.subr.mxu0 0.0
        %930 = vmatpush1.msra.mxu0 0.0
        %931 = vmatprep.subr.mxu0 0.0
        %932 = vmatpush1.msra.mxu0 0.0
        %933 = vmatprep.subr.mxu0 0.0
        %934 = vmatpush1.msra.mxu0 0.0
        %935 = vmatprep.subr.mxu0 0.0
        %936 = vmatpush1.msra.mxu0 0.0
        %937 = vmatprep.subr.mxu0 0.0
        %938 = vmatpush1.msra.mxu0 0.0
        %939 = vmatprep.subr.mxu0 0.0
        %940 = vmatpush1.msra.mxu0 0.0
        %941 = vmatprep.subr.mxu0 0.0
        %942 = vmatpush1.msra.mxu0 0.0
        %943 = vmatprep.subr.mxu0 0.0
        %944 = vmatpush1.msra.mxu0 0.0
        %945 = vmatprep.subr.mxu0 0.0
        %946 = vmatpush1.msra.mxu0 0.0
        %947 = vmatprep.subr.mxu0 0.0
        %948 = vmatpush1.msra.mxu0 0.0
        %949 = vmatprep.subr.mxu0 0.0
        %950 = vmatpush1.msra.mxu0 0.0
        %951 = vmatprep.subr.mxu0 0.0
        %952 = vmatpush1.msra.mxu0 0.0
        %953 = vmatprep.subr.mxu0 0.0
        %954 = vmatpush1.msra.mxu0 0.0
        %955 = vmatprep.subr.mxu0 0.0
        %956 = vmatpush1.msra.mxu0 0.0
        %957 = vmatprep.subr.mxu0 0.0
        %958 = vmatpush1.msra.mxu0 0.0
        %959 = vmatprep.subr.mxu0 0.0
        %960 = vmatpush1.msra.mxu0 0.0
        %961 = vmatprep.subr.mxu0 0.0
        %962 = vmatpush1.msra.mxu0 0.0
        %963 = vmatprep.subr.mxu0 0.0
        %964 = vmatpush1.msra.mxu0 0.0
        %965 = vmatprep.subr.mxu0 0.0
        %966 = vmatpush1.msra.mxu0 0.0
        %967 = vmatprep.subr.mxu0 0.0
        %968 = vmatpush1.msra.mxu0 0.0
        %969 = vmatprep.subr.mxu0 0.0
        %970 = vmatpush1.msra.mxu0 0.0
        %971 = vmatprep.mubr.f32.mxu0 0.0
        %972 = vmatmul.mubr.f32.gmra.mrb[0].mxu0 %v899
        %v973 = vpop.f32.mrb[0].mxu0
        %v974 = vadd.f32 0.0, %v973
        %v975 = vpop.f32.mrb[0].mxu0
        %v976 = vadd.f32 0.0, %v975
        %977 = vdwg.mxu0
        %v978 = vadd.f32 %v881, %v974
        %v979 = vadd.f32 %v882, %v976
        %980 = vrot.lane.b32.xlu0 %v218, 111
        %v981 = vpop.permute.xlu0 %980
        %982 = vrot.lane.b32.xlu0 %v220, 111
        %v983 = vpop.permute.xlu0 %982
        %vm984 = vcmp.lt.s32.totalorder %v197, 111
        %v985 = vsel %vm984, %v981, %v983
        %v986 = vsel %vm984, %v983, %v981
        %v987 = vsel %vm215, 1, 0
        %v988 = vsel %vm216, 1, 0
        %vm989 = vcmp.eq.s32.totalorder %v987, 1
        %vm990 = vcmp.eq.s32.totalorder %v988, 1
        %v991 = vsel %vm989, %v985, 0.0
        %v992 = vsel %vm990, %v986, 0.0
        %s993 = scalar_lea.vmem %s1, 32
        %v994 = vld [vmem:[%s993] sm:$0xf]
        %v996 = vsel %vm251, %v994, 0
        %v999 = vsel %vm255, %v991, 0
        %v1002 = vsel %vm255, %v992, 0
        %1004 = vmatprep.subr.mxu0 %v1002
        %1005 = vmatpush1.msra.mxu0 %v999
        %1006 = vmatprep.subr.mxu0 0.0
        %1007 = vmatpush1.msra.mxu0 0.0
        %1008 = vmatprep.subr.mxu0 0.0
        %1009 = vmatpush1.msra.mxu0 0.0
        %1010 = vmatprep.subr.mxu0 0.0
        %1011 = vmatpush1.msra.mxu0 0.0
        %1012 = vmatprep.subr.mxu0 0.0
        %1013 = vmatpush1.msra.mxu0 0.0
        %1014 = vmatprep.subr.mxu0 0.0
        %1015 = vmatpush1.msra.mxu0 0.0
        %1016 = vmatprep.subr.mxu0 0.0
        %1017 = vmatpush1.msra.mxu0 0.0
        %1018 = vmatprep.subr.mxu0 0.0
        %1019 = vmatpush1.msra.mxu0 0.0
        %1020 = vmatprep.subr.mxu0 0.0
        %1021 = vmatpush1.msra.mxu0 0.0
        %1022 = vmatprep.subr.mxu0 0.0
        %1023 = vmatpush1.msra.mxu0 0.0
        %1024 = vmatprep.subr.mxu0 0.0
        %1025 = vmatpush1.msra.mxu0 0.0
        %1026 = vmatprep.subr.mxu0 0.0
        %1027 = vmatpush1.msra.mxu0 0.0
        %1028 = vmatprep.subr.mxu0 0.0
        %1029 = vmatpush1.msra.mxu0 0.0
        %1030 = vmatprep.subr.mxu0 0.0
        %1031 = vmatpush1.msra.mxu0 0.0
        %1032 = vmatprep.subr.mxu0 0.0
        %1033 = vmatpush1.msra.mxu0 0.0
        %1034 = vmatprep.subr.mxu0 0.0
        %1035 = vmatpush1.msra.mxu0 0.0
        %1036 = vmatprep.subr.mxu0 0.0
        %1037 = vmatpush1.msra.mxu0 0.0
        %1038 = vmatprep.subr.mxu0 0.0
        %1039 = vmatpush1.msra.mxu0 0.0
        %1040 = vmatprep.subr.mxu0 0.0
        %1041 = vmatpush1.msra.mxu0 0.0
        %1042 = vmatprep.subr.mxu0 0.0
        %1043 = vmatpush1.msra.mxu0 0.0
        %1044 = vmatprep.subr.mxu0 0.0
        %1045 = vmatpush1.msra.mxu0 0.0
        %1046 = vmatprep.subr.mxu0 0.0
        %1047 = vmatpush1.msra.mxu0 0.0
        %1048 = vmatprep.subr.mxu0 0.0
        %1049 = vmatpush1.msra.mxu0 0.0
        %1050 = vmatprep.subr.mxu0 0.0
        %1051 = vmatpush1.msra.mxu0 0.0
        %1052 = vmatprep.subr.mxu0 0.0
        %1053 = vmatpush1.msra.mxu0 0.0
        %1054 = vmatprep.subr.mxu0 0.0
        %1055 = vmatpush1.msra.mxu0 0.0
        %1056 = vmatprep.subr.mxu0 0.0
        %1057 = vmatpush1.msra.mxu0 0.0
        %1058 = vmatprep.subr.mxu0 0.0
        %1059 = vmatpush1.msra.mxu0 0.0
        %1060 = vmatprep.subr.mxu0 0.0
        %1061 = vmatpush1.msra.mxu0 0.0
        %1062 = vmatprep.subr.mxu0 0.0
        %1063 = vmatpush1.msra.mxu0 0.0
        %1064 = vmatprep.subr.mxu0 0.0
        %1065 = vmatpush1.msra.mxu0 0.0
        %1066 = vmatprep.subr.mxu0 0.0
        %1067 = vmatpush1.msra.mxu0 0.0
        %1068 = vmatprep.mubr.f32.mxu0 0.0
        %1069 = vmatmul.mubr.f32.gmra.mrb[0].mxu0 %v996
        %v1070 = vpop.f32.mrb[0].mxu0
        %v1071 = vadd.f32 0.0, %v1070
        %v1072 = vpop.f32.mrb[0].mxu0
        %v1073 = vadd.f32 0.0, %v1072
        %1074 = vdwg.mxu0
        %v1075 = vadd.f32 %v978, %v1071
        %v1076 = vadd.f32 %v979, %v1073
        %v1077 = vld [vmem:[%s2] sm:$0xf]
        %1079 = vset.pattern.permute.xlu0 0
        %1080 = vperm.xlu0 %1079, %v1077
        %v1081 = vpop.permute.xlu0 %1080
        %v1083 = vadd.f32 %v1075, %v1081
        %v1084 = vadd.f32 %v1076, %v1081
        %v1085 = vmax.f32 %v1083, 0.0
        %v1086 = vmax.f32 %v1084, 0.0
        %1087 = vrot.lane.b32.xlu0 %v1085, 17
        %v1088 = vpop.permute.xlu0 %1087
        %1089 = vrot.lane.b32.xlu0 %v1086, 17
        %v1090 = vpop.permute.xlu0 %1089
        %v1091 = vsel %vm226, %v1088, %v1090
        %v1092 = vsel %vm226, %v1090, %v1088
        %v1093 = vsel %vm231, %v1092, 0.0
        %v1094 = vsel %vm232, %v1091, 0.0
        %v1095 = vld [vmem:[%s3] sm:$0xf]
        %1096 = vrot.lane.b32.xlu0 %v1085, 16
        %v1097 = vpop.permute.xlu0 %1096
        %1098 = vrot.lane.b32.xlu0 %v1086, 16
        %v1099 = vpop.permute.xlu0 %1098
        %v1100 = vsel %vm240, %v1097, %v1099
        %v1101 = vsel %vm240, %v1099, %v1097
        %v1102 = vsel %vm245, %v1101, 0.0
        %v1103 = vsel %vm246, %v1100, 0.0
        %s1104 = scalar_lea.vmem %s3, 4
        %v1105 = vld [vmem:[%s1104] sm:$0xf]
        %v1107 = vsel %vm251, %v1105, 0
        %v1110 = vsel %vm255, %v1102, 0
        %v1113 = vsel %vm255, %v1103, 0
        %1115 = vmatprep.subr.mxu0 %v1113
        %1116 = vmatpush1.msra.mxu0 %v1110
        %1117 = vmatprep.subr.mxu0 0.0
        %1118 = vmatpush1.msra.mxu0 0.0
        %1119 = vmatprep.subr.mxu0 0.0
        %1120 = vmatpush1.msra.mxu0 0.0
        %1121 = vmatprep.subr.mxu0 0.0
        %1122 = vmatpush1.msra.mxu0 0.0
        %1123 = vmatprep.subr.mxu0 0.0
        %1124 = vmatpush1.msra.mxu0 0.0
        %1125 = vmatprep.subr.mxu0 0.0
        %1126 = vmatpush1.msra.mxu0 0.0
        %1127 = vmatprep.subr.mxu0 0.0
        %1128 = vmatpush1.msra.mxu0 0.0
        %1129 = vmatprep.subr.mxu0 0.0
        %1130 = vmatpush1.msra.mxu0 0.0
        %1131 = vmatprep.subr.mxu0 0.0
        %1132 = vmatpush1.msra.mxu0 0.0
        %1133 = vmatprep.subr.mxu0 0.0
        %1134 = vmatpush1.msra.mxu0 0.0
        %1135 = vmatprep.subr.mxu0 0.0
        %1136 = vmatpush1.msra.mxu0 0.0
        %1137 = vmatprep.subr.mxu0 0.0
        %1138 = vmatpush1.msra.mxu0 0.0
        %1139 = vmatprep.subr.mxu0 0.0
        %1140 = vmatpush1.msra.mxu0 0.0
        %1141 = vmatprep.subr.mxu0 0.0
        %1142 = vmatpush1.msra.mxu0 0.0
        %1143 = vmatprep.subr.mxu0 0.0
        %1144 = vmatpush1.msra.mxu0 0.0
        %1145 = vmatprep.subr.mxu0 0.0
        %1146 = vmatpush1.msra.mxu0 0.0
        %1147 = vmatprep.subr.mxu0 0.0
        %1148 = vmatpush1.msra.mxu0 0.0
        %1149 = vmatprep.subr.mxu0 0.0
        %1150 = vmatpush1.msra.mxu0 0.0
        %1151 = vmatprep.subr.mxu0 0.0
        %1152 = vmatpush1.msra.mxu0 0.0
        %1153 = vmatprep.subr.mxu0 0.0
        %1154 = vmatpush1.msra.mxu0 0.0
        %1155 = vmatprep.subr.mxu0 0.0
        %1156 = vmatpush1.msra.mxu0 0.0
        %1157 = vmatprep.subr.mxu0 0.0
        %1158 = vmatpush1.msra.mxu0 0.0
        %1159 = vmatprep.subr.mxu0 0.0
        %1160 = vmatpush1.msra.mxu0 0.0
        %1161 = vmatprep.subr.mxu0 0.0
        %1162 = vmatpush1.msra.mxu0 0.0
        %1163 = vmatprep.subr.mxu0 0.0
        %1164 = vmatpush1.msra.mxu0 0.0
        %1165 = vmatprep.subr.mxu0 0.0
        %1166 = vmatpush1.msra.mxu0 0.0
        %1167 = vmatprep.subr.mxu0 0.0
        %1168 = vmatpush1.msra.mxu0 0.0
        %1169 = vmatprep.subr.mxu0 0.0
        %1170 = vmatpush1.msra.mxu0 0.0
        %1171 = vmatprep.subr.mxu0 0.0
        %1172 = vmatpush1.msra.mxu0 0.0
        %1173 = vmatprep.subr.mxu0 0.0
        %1174 = vmatpush1.msra.mxu0 0.0
        %1175 = vmatprep.subr.mxu0 0.0
        %1176 = vmatpush1.msra.mxu0 0.0
        %1177 = vmatprep.subr.mxu0 0.0
        %1178 = vmatpush1.msra.mxu0 0.0
        %1179 = vmatprep.mubr.f32.mxu0 0.0
        %1180 = vmatmul.mubr.f32.gmra.mrb[0].mxu0 %v1107
        %v1181 = vpop.f32.mrb[0].mxu0
        %v1182 = vadd.f32 0.0, %v1181
        %v1183 = vpop.f32.mrb[0].mxu0
        %v1184 = vadd.f32 0.0, %v1183
        %1185 = vdwg.mxu0
        %v1187 = vsel %vm251, %v1095, 0
        %v1190 = vsel %vm255, %v1093, 0
        %v1193 = vsel %vm255, %v1094, 0
        %1195 = vmatprep.subr.mxu0 %v1193
        %1196 = vmatpush1.msra.mxu0 %v1190
        %1197 = vmatprep.subr.mxu0 0.0
        %1198 = vmatpush1.msra.mxu0 0.0
        %1199 = vmatprep.subr.mxu0 0.0
        %1200 = vmatpush1.msra.mxu0 0.0
        %1201 = vmatprep.subr.mxu0 0.0
        %1202 = vmatpush1.msra.mxu0 0.0
        %1203 = vmatprep.subr.mxu0 0.0
        %1204 = vmatpush1.msra.mxu0 0.0
        %1205 = vmatprep.subr.mxu0 0.0
        %1206 = vmatpush1.msra.mxu0 0.0
        %1207 = vmatprep.subr.mxu0 0.0
        %1208 = vmatpush1.msra.mxu0 0.0
        %1209 = vmatprep.subr.mxu0 0.0
        %1210 = vmatpush1.msra.mxu0 0.0
        %1211 = vmatprep.subr.mxu0 0.0
        %1212 = vmatpush1.msra.mxu0 0.0
        %1213 = vmatprep.subr.mxu0 0.0
        %1214 = vmatpush1.msra.mxu0 0.0
        %1215 = vmatprep.subr.mxu0 0.0
        %1216 = vmatpush1.msra.mxu0 0.0
        %1217 = vmatprep.subr.mxu0 0.0
        %1218 = vmatpush1.msra.mxu0 0.0
        %1219 = vmatprep.subr.mxu0 0.0
        %1220 = vmatpush1.msra.mxu0 0.0
        %1221 = vmatprep.subr.mxu0 0.0
        %1222 = vmatpush1.msra.mxu0 0.0
        %1223 = vmatprep.subr.mxu0 0.0
        %1224 = vmatpush1.msra.mxu0 0.0
        %1225 = vmatprep.subr.mxu0 0.0
        %1226 = vmatpush1.msra.mxu0 0.0
        %1227 = vmatprep.subr.mxu0 0.0
        %1228 = vmatpush1.msra.mxu0 0.0
        %1229 = vmatprep.subr.mxu0 0.0
        %1230 = vmatpush1.msra.mxu0 0.0
        %1231 = vmatprep.subr.mxu0 0.0
        %1232 = vmatpush1.msra.mxu0 0.0
        %1233 = vmatprep.subr.mxu0 0.0
        %1234 = vmatpush1.msra.mxu0 0.0
        %1235 = vmatprep.subr.mxu0 0.0
        %1236 = vmatpush1.msra.mxu0 0.0
        %1237 = vmatprep.subr.mxu0 0.0
        %1238 = vmatpush1.msra.mxu0 0.0
        %1239 = vmatprep.subr.mxu0 0.0
        %1240 = vmatpush1.msra.mxu0 0.0
        %1241 = vmatprep.subr.mxu0 0.0
        %1242 = vmatpush1.msra.mxu0 0.0
        %1243 = vmatprep.subr.mxu0 0.0
        %1244 = vmatpush1.msra.mxu0 0.0
        %1245 = vmatprep.subr.mxu0 0.0
        %1246 = vmatpush1.msra.mxu0 0.0
        %1247 = vmatprep.subr.mxu0 0.0
        %1248 = vmatpush1.msra.mxu0 0.0
        %1249 = vmatprep.subr.mxu0 0.0
        %1250 = vmatpush1.msra.mxu0 0.0
        %1251 = vmatprep.subr.mxu0 0.0
        %1252 = vmatpush1.msra.mxu0 0.0
        %1253 = vmatprep.subr.mxu0 0.0
        %1254 = vmatpush1.msra.mxu0 0.0
        %1255 = vmatprep.subr.mxu0 0.0
        %1256 = vmatpush1.msra.mxu0 0.0
        %1257 = vmatprep.subr.mxu0 0.0
        %1258 = vmatpush1.msra.mxu0 0.0
        %1259 = vmatprep.mubr.f32.mxu0 0.0
        %1260 = vmatmul.mubr.f32.gmra.mrb[0].mxu0 %v1187
        %v1261 = vpop.f32.mrb[0].mxu0
        %v1262 = vadd.f32 %v1182, %v1261
        %v1263 = vpop.f32.mrb[0].mxu0
        %v1264 = vadd.f32 %v1184, %v1263
        %1265 = vdwg.mxu0
        %1266 = vrot.lane.b32.xlu0 %v1085, 15
        %v1267 = vpop.permute.xlu0 %1266
        %1268 = vrot.lane.b32.xlu0 %v1086, 15
        %v1269 = vpop.permute.xlu0 %1268
        %v1270 = vsel %vm417, %v1267, %v1269
        %v1271 = vsel %vm417, %v1269, %v1267
        %v1272 = vsel %vm422, %v1271, 0.0
        %v1273 = vsel %vm423, %v1270, 0.0
        %s1274 = scalar_lea.vmem %s3, 8
        %v1275 = vld [vmem:[%s1274] sm:$0xf]
        %v1277 = vsel %vm251, %v1275, 0
        %v1280 = vsel %vm255, %v1272, 0
        %v1283 = vsel %vm255, %v1273, 0
        %1285 = vmatprep.subr.mxu0 %v1283
        %1286 = vmatpush1.msra.mxu0 %v1280
        %1287 = vmatprep.subr.mxu0 0.0
        %1288 = vmatpush1.msra.mxu0 0.0
        %1289 = vmatprep.subr.mxu0 0.0
        %1290 = vmatpush1.msra.mxu0 0.0
        %1291 = vmatprep.subr.mxu0 0.0
        %1292 = vmatpush1.msra.mxu0 0.0
        %1293 = vmatprep.subr.mxu0 0.0
        %1294 = vmatpush1.msra.mxu0 0.0
        %1295 = vmatprep.subr.mxu0 0.0
        %1296 = vmatpush1.msra.mxu0 0.0
        %1297 = vmatprep.subr.mxu0 0.0
        %1298 = vmatpush1.msra.mxu0 0.0
        %1299 = vmatprep.subr.mxu0 0.0
        %1300 = vmatpush1.msra.mxu0 0.0
        %1301 = vmatprep.subr.mxu0 0.0
        %1302 = vmatpush1.msra.mxu0 0.0
        %1303 = vmatprep.subr.mxu0 0.0
        %1304 = vmatpush1.msra.mxu0 0.0
        %1305 = vmatprep.subr.mxu0 0.0
        %1306 = vmatpush1.msra.mxu0 0.0
        %1307 = vmatprep.subr.mxu0 0.0
        %1308 = vmatpush1.msra.mxu0 0.0
        %1309 = vmatprep.subr.mxu0 0.0
        %1310 = vmatpush1.msra.mxu0 0.0
        %1311 = vmatprep.subr.mxu0 0.0
        %1312 = vmatpush1.msra.mxu0 0.0
        %1313 = vmatprep.subr.mxu0 0.0
        %1314 = vmatpush1.msra.mxu0 0.0
        %1315 = vmatprep.subr.mxu0 0.0
        %1316 = vmatpush1.msra.mxu0 0.0
        %1317 = vmatprep.subr.mxu0 0.0
        %1318 = vmatpush1.msra.mxu0 0.0
        %1319 = vmatprep.subr.mxu0 0.0
        %1320 = vmatpush1.msra.mxu0 0.0
        %1321 = vmatprep.subr.mxu0 0.0
        %1322 = vmatpush1.msra.mxu0 0.0
        %1323 = vmatprep.subr.mxu0 0.0
        %1324 = vmatpush1.msra.mxu0 0.0
        %1325 = vmatprep.subr.mxu0 0.0
        %1326 = vmatpush1.msra.mxu0 0.0
        %1327 = vmatprep.subr.mxu0 0.0
        %1328 = vmatpush1.msra.mxu0 0.0
        %1329 = vmatprep.subr.mxu0 0.0
        %1330 = vmatpush1.msra.mxu0 0.0
        %1331 = vmatprep.subr.mxu0 0.0
        %1332 = vmatpush1.msra.mxu0 0.0
        %1333 = vmatprep.subr.mxu0 0.0
        %1334 = vmatpush1.msra.mxu0 0.0
        %1335 = vmatprep.subr.mxu0 0.0
        %1336 = vmatpush1.msra.mxu0 0.0
        %1337 = vmatprep.subr.mxu0 0.0
        %1338 = vmatpush1.msra.mxu0 0.0
        %1339 = vmatprep.subr.mxu0 0.0
        %1340 = vmatpush1.msra.mxu0 0.0
        %1341 = vmatprep.subr.mxu0 0.0
        %1342 = vmatpush1.msra.mxu0 0.0
        %1343 = vmatprep.subr.mxu0 0.0
        %1344 = vmatpush1.msra.mxu0 0.0
        %1345 = vmatprep.subr.mxu0 0.0
        %1346 = vmatpush1.msra.mxu0 0.0
        %1347 = vmatprep.subr.mxu0 0.0
        %1348 = vmatpush1.msra.mxu0 0.0
        %1349 = vmatprep.mubr.f32.mxu0 0.0
        %1350 = vmatmul.mubr.f32.gmra.mrb[0].mxu0 %v1277
        %v1351 = vpop.f32.mrb[0].mxu0
        %v1352 = vadd.f32 0.0, %v1351
        %v1353 = vpop.f32.mrb[0].mxu0
        %v1354 = vadd.f32 0.0, %v1353
        %1355 = vdwg.mxu0
        %v1356 = vadd.f32 %v1262, %v1352
        %v1357 = vadd.f32 %v1264, %v1354
        %1358 = vrot.lane.b32.xlu0 %v1085, 1
        %v1359 = vpop.permute.xlu0 %1358
        %1360 = vrot.lane.b32.xlu0 %v1086, 1
        %v1361 = vpop.permute.xlu0 %1360
        %v1362 = vsel %vm514, %v1359, %v1361
        %v1363 = vsel %vm514, %v1361, %v1359
        %v1364 = vsel %vm519, %v1363, 0.0
        %v1365 = vsel %vm520, %v1362, 0.0
        %s1366 = scalar_lea.vmem %s3, 12
        %v1367 = vld [vmem:[%s1366] sm:$0xf]
        %v1369 = vsel %vm251, %v1367, 0
        %v1372 = vsel %vm255, %v1364, 0
        %v1375 = vsel %vm255, %v1365, 0
        %1377 = vmatprep.subr.mxu0 %v1375
        %1378 = vmatpush1.msra.mxu0 %v1372
        %1379 = vmatprep.subr.mxu0 0.0
        %1380 = vmatpush1.msra.mxu0 0.0
        %1381 = vmatprep.subr.mxu0 0.0
        %1382 = vmatpush1.msra.mxu0 0.0
        %1383 = vmatprep.subr.mxu0 0.0
        %1384 = vmatpush1.msra.mxu0 0.0
        %1385 = vmatprep.subr.mxu0 0.0
        %1386 = vmatpush1.msra.mxu0 0.0
        %1387 = vmatprep.subr.mxu0 0.0
        %1388 = vmatpush1.msra.mxu0 0.0
        %1389 = vmatprep.subr.mxu0 0.0
        %1390 = vmatpush1.msra.mxu0 0.0
        %1391 = vmatprep.subr.mxu0 0.0
        %1392 = vmatpush1.msra.mxu0 0.0
        %1393 = vmatprep.subr.mxu0 0.0
        %1394 = vmatpush1.msra.mxu0 0.0
        %1395 = vmatprep.subr.mxu0 0.0
        %1396 = vmatpush1.msra.mxu0 0.0
        %1397 = vmatprep.subr.mxu0 0.0
        %1398 = vmatpush1.msra.mxu0 0.0
        %1399 = vmatprep.subr.mxu0 0.0
        %1400 = vmatpush1.msra.mxu0 0.0
        %1401 = vmatprep.subr.mxu0 0.0
        %1402 = vmatpush1.msra.mxu0 0.0
        %1403 = vmatprep.subr.mxu0 0.0
        %1404 = vmatpush1.msra.mxu0 0.0
        %1405 = vmatprep.subr.mxu0 0.0
        %1406 = vmatpush1.msra.mxu0 0.0
        %1407 = vmatprep.subr.mxu0 0.0
        %1408 = vmatpush1.msra.mxu0 0.0
        %1409 = vmatprep.subr.mxu0 0.0
        %1410 = vmatpush1.msra.mxu0 0.0
        %1411 = vmatprep.subr.mxu0 0.0
        %1412 = vmatpush1.msra.mxu0 0.0
        %1413 = vmatprep.subr.mxu0 0.0
        %1414 = vmatpush1.msra.mxu0 0.0
        %1415 = vmatprep.subr.mxu0 0.0
        %1416 = vmatpush1.msra.mxu0 0.0
        %1417 = vmatprep.subr.mxu0 0.0
        %1418 = vmatpush1.msra.mxu0 0.0
        %1419 = vmatprep.subr.mxu0 0.0
        %1420 = vmatpush1.msra.mxu0 0.0
        %1421 = vmatprep.subr.mxu0 0.0
        %1422 = vmatpush1.msra.mxu0 0.0
        %1423 = vmatprep.subr.mxu0 0.0
        %1424 = vmatpush1.msra.mxu0 0.0
        %1425 = vmatprep.subr.mxu0 0.0
        %1426 = vmatpush1.msra.mxu0 0.0
        %1427 = vmatprep.subr.mxu0 0.0
        %1428 = vmatpush1.msra.mxu0 0.0
        %1429 = vmatprep.subr.mxu0 0.0
        %1430 = vmatpush1.msra.mxu0 0.0
        %1431 = vmatprep.subr.mxu0 0.0
        %1432 = vmatpush1.msra.mxu0 0.0
        %1433 = vmatprep.subr.mxu0 0.0
        %1434 = vmatpush1.msra.mxu0 0.0
        %1435 = vmatprep.subr.mxu0 0.0
        %1436 = vmatpush1.msra.mxu0 0.0
        %1437 = vmatprep.subr.mxu0 0.0
        %1438 = vmatpush1.msra.mxu0 0.0
        %1439 = vmatprep.subr.mxu0 0.0
        %1440 = vmatpush1.msra.mxu0 0.0
        %1441 = vmatprep.mubr.f32.mxu0 0.0
        %1442 = vmatmul.mubr.f32.gmra.mrb[0].mxu0 %v1369
        %v1443 = vpop.f32.mrb[0].mxu0
        %v1444 = vadd.f32 0.0, %v1443
        %v1445 = vpop.f32.mrb[0].mxu0
        %v1446 = vadd.f32 0.0, %v1445
        %1447 = vdwg.mxu0
        %v1448 = vadd.f32 %v1356, %v1444
        %v1449 = vadd.f32 %v1357, %v1446
        %s1450 = scalar_lea.vmem %s3, 16
        %v1451 = vld [vmem:[%s1450] sm:$0xf]
        %v1453 = vsel %vm251, %v1451, 0
        %v1456 = vsel %vm255, %v1085, 0
        %v1459 = vsel %vm255, %v1086, 0
        %1461 = vmatprep.subr.mxu0 %v1459
        %1462 = vmatpush1.msra.mxu0 %v1456
        %1463 = vmatprep.subr.mxu0 0.0
        %1464 = vmatpush1.msra.mxu0 0.0
        %1465 = vmatprep.subr.mxu0 0.0
        %1466 = vmatpush1.msra.mxu0 0.0
        %1467 = vmatprep.subr.mxu0 0.0
        %1468 = vmatpush1.msra.mxu0 0.0
        %1469 = vmatprep.subr.mxu0 0.0
        %1470 = vmatpush1.msra.mxu0 0.0
        %1471 = vmatprep.subr.mxu0 0.0
        %1472 = vmatpush1.msra.mxu0 0.0
        %1473 = vmatprep.subr.mxu0 0.0
        %1474 = vmatpush1.msra.mxu0 0.0
        %1475 = vmatprep.subr.mxu0 0.0
        %1476 = vmatpush1.msra.mxu0 0.0
        %1477 = vmatprep.subr.mxu0 0.0
        %1478 = vmatpush1.msra.mxu0 0.0
        %1479 = vmatprep.subr.mxu0 0.0
        %1480 = vmatpush1.msra.mxu0 0.0
        %1481 = vmatprep.subr.mxu0 0.0
        %1482 = vmatpush1.msra.mxu0 0.0
        %1483 = vmatprep.subr.mxu0 0.0
        %1484 = vmatpush1.msra.mxu0 0.0
        %1485 = vmatprep.subr.mxu0 0.0
        %1486 = vmatpush1.msra.mxu0 0.0
        %1487 = vmatprep.subr.mxu0 0.0
        %1488 = vmatpush1.msra.mxu0 0.0
        %1489 = vmatprep.subr.mxu0 0.0
        %1490 = vmatpush1.msra.mxu0 0.0
        %1491 = vmatprep.subr.mxu0 0.0
        %1492 = vmatpush1.msra.mxu0 0.0
        %1493 = vmatprep.subr.mxu0 0.0
        %1494 = vmatpush1.msra.mxu0 0.0
        %1495 = vmatprep.subr.mxu0 0.0
        %1496 = vmatpush1.msra.mxu0 0.0
        %1497 = vmatprep.subr.mxu0 0.0
        %1498 = vmatpush1.msra.mxu0 0.0
        %1499 = vmatprep.subr.mxu0 0.0
        %1500 = vmatpush1.msra.mxu0 0.0
        %1501 = vmatprep.subr.mxu0 0.0
        %1502 = vmatpush1.msra.mxu0 0.0
        %1503 = vmatprep.subr.mxu0 0.0
        %1504 = vmatpush1.msra.mxu0 0.0
        %1505 = vmatprep.subr.mxu0 0.0
        %1506 = vmatpush1.msra.mxu0 0.0
        %1507 = vmatprep.subr.mxu0 0.0
        %1508 = vmatpush1.msra.mxu0 0.0
        %1509 = vmatprep.subr.mxu0 0.0
        %1510 = vmatpush1.msra.mxu0 0.0
        %1511 = vmatprep.subr.mxu0 0.0
        %1512 = vmatpush1.msra.mxu0 0.0
        %1513 = vmatprep.subr.mxu0 0.0
        %1514 = vmatpush1.msra.mxu0 0.0
        %1515 = vmatprep.subr.mxu0 0.0
        %1516 = vmatpush1.msra.mxu0 0.0
        %1517 = vmatprep.subr.mxu0 0.0
        %1518 = vmatpush1.msra.mxu0 0.0
        %1519 = vmatprep.subr.mxu0 0.0
        %1520 = vmatpush1.msra.mxu0 0.0
        %1521 = vmatprep.subr.mxu0 0.0
        %1522 = vmatpush1.msra.mxu0 0.0
        %1523 = vmatprep.subr.mxu0 0.0
        %1524 = vmatpush1.msra.mxu0 0.0
        %1525 = vmatprep.mubr.f32.mxu0 0.0
        %1526 = vmatmul.mubr.f32.gmra.mrb[0].mxu0 %v1453
        %v1527 = vpop.f32.mrb[0].mxu0
        %v1528 = vadd.f32 0.0, %v1527
        %v1529 = vpop.f32.mrb[0].mxu0
        %v1530 = vadd.f32 0.0, %v1529
        %1531 = vdwg.mxu0
        %v1532 = vadd.f32 %v1448, %v1528
        %v1533 = vadd.f32 %v1449, %v1530
        %1534 = vrot.lane.b32.xlu0 %v1085, 127
        %v1535 = vpop.permute.xlu0 %1534
        %1536 = vrot.lane.b32.xlu0 %v1086, 127
        %v1537 = vpop.permute.xlu0 %1536
        %v1538 = vsel %vm693, %v1535, %v1537
        %v1539 = vsel %vm693, %v1537, %v1535
        %v1540 = vsel %vm698, %v1538, 0.0
        %v1541 = vsel %vm699, %v1539, 0.0
        %s1542 = scalar_lea.vmem %s3, 20
        %v1543 = vld [vmem:[%s1542] sm:$0xf]
        %v1545 = vsel %vm251, %v1543, 0
        %v1548 = vsel %vm255, %v1540, 0
        %v1551 = vsel %vm255, %v1541, 0
        %1553 = vmatprep.subr.mxu0 %v1551
        %1554 = vmatpush1.msra.mxu0 %v1548
        %1555 = vmatprep.subr.mxu0 0.0
        %1556 = vmatpush1.msra.mxu0 0.0
        %1557 = vmatprep.subr.mxu0 0.0
        %1558 = vmatpush1.msra.mxu0 0.0
        %1559 = vmatprep.subr.mxu0 0.0
        %1560 = vmatpush1.msra.mxu0 0.0
        %1561 = vmatprep.subr.mxu0 0.0
        %1562 = vmatpush1.msra.mxu0 0.0
        %1563 = vmatprep.subr.mxu0 0.0
        %1564 = vmatpush1.msra.mxu0 0.0
        %1565 = vmatprep.subr.mxu0 0.0
        %1566 = vmatpush1.msra.mxu0 0.0
        %1567 = vmatprep.subr.mxu0 0.0
        %1568 = vmatpush1.msra.mxu0 0.0
        %1569 = vmatprep.subr.mxu0 0.0
        %1570 = vmatpush1.msra.mxu0 0.0
        %1571 = vmatprep.subr.mxu0 0.0
        %1572 = vmatpush1.msra.mxu0 0.0
        %1573 = vmatprep.subr.mxu0 0.0
        %1574 = vmatpush1.msra.mxu0 0.0
        %1575 = vmatprep.subr.mxu0 0.0
        %1576 = vmatpush1.msra.mxu0 0.0
        %1577 = vmatprep.subr.mxu0 0.0
        %1578 = vmatpush1.msra.mxu0 0.0
        %1579 = vmatprep.subr.mxu0 0.0
        %1580 = vmatpush1.msra.mxu0 0.0
        %1581 = vmatprep.subr.mxu0 0.0
        %1582 = vmatpush1.msra.mxu0 0.0
        %1583 = vmatprep.subr.mxu0 0.0
        %1584 = vmatpush1.msra.mxu0 0.0
        %1585 = vmatprep.subr.mxu0 0.0
        %1586 = vmatpush1.msra.mxu0 0.0
        %1587 = vmatprep.subr.mxu0 0.0
        %1588 = vmatpush1.msra.mxu0 0.0
        %1589 = vmatprep.subr.mxu0 0.0
        %1590 = vmatpush1.msra.mxu0 0.0
        %1591 = vmatprep.subr.mxu0 0.0
        %1592 = vmatpush1.msra.mxu0 0.0
        %1593 = vmatprep.subr.mxu0 0.0
        %1594 = vmatpush1.msra.mxu0 0.0
        %1595 = vmatprep.subr.mxu0 0.0
        %1596 = vmatpush1.msra.mxu0 0.0
        %1597 = vmatprep.subr.mxu0 0.0
        %1598 = vmatpush1.msra.mxu0 0.0
        %1599 = vmatprep.subr.mxu0 0.0
        %1600 = vmatpush1.msra.mxu0 0.0
        %1601 = vmatprep.subr.mxu0 0.0
        %1602 = vmatpush1.msra.mxu0 0.0
        %1603 = vmatprep.subr.mxu0 0.0
        %1604 = vmatpush1.msra.mxu0 0.0
        %1605 = vmatprep.subr.mxu0 0.0
        %1606 = vmatpush1.msra.mxu0 0.0
        %1607 = vmatprep.subr.mxu0 0.0
        %1608 = vmatpush1.msra.mxu0 0.0
        %1609 = vmatprep.subr.mxu0 0.0
        %1610 = vmatpush1.msra.mxu0 0.0
        %1611 = vmatprep.subr.mxu0 0.0
        %1612 = vmatpush1.msra.mxu0 0.0
        %1613 = vmatprep.subr.mxu0 0.0
        %1614 = vmatpush1.msra.mxu0 0.0
        %1615 = vmatprep.subr.mxu0 0.0
        %1616 = vmatpush1.msra.mxu0 0.0
        %1617 = vmatprep.mubr.f32.mxu0 0.0
        %1618 = vmatmul.mubr.f32.gmra.mrb[0].mxu0 %v1545
        %v1619 = vpop.f32.mrb[0].mxu0
        %v1620 = vadd.f32 0.0, %v1619
        %v1621 = vpop.f32.mrb[0].mxu0
        %v1622 = vadd.f32 0.0, %v1621
        %1623 = vdwg.mxu0
        %v1624 = vadd.f32 %v1532, %v1620
        %v1625 = vadd.f32 %v1533, %v1622
        %1626 = vrot.lane.b32.xlu0 %v1085, 113
        %v1627 = vpop.permute.xlu0 %1626
        %1628 = vrot.lane.b32.xlu0 %v1086, 113
        %v1629 = vpop.permute.xlu0 %1628
        %v1630 = vsel %vm790, %v1627, %v1629
        %v1631 = vsel %vm790, %v1629, %v1627
        %v1632 = vsel %vm795, %v1630, 0.0
        %v1633 = vsel %vm796, %v1631, 0.0
        %s1634 = scalar_lea.vmem %s3, 24
        %v1635 = vld [vmem:[%s1634] sm:$0xf]
        %v1637 = vsel %vm251, %v1635, 0
        %v1640 = vsel %vm255, %v1632, 0
        %v1643 = vsel %vm255, %v1633, 0
        %1645 = vmatprep.subr.mxu0 %v1643
        %1646 = vmatpush1.msra.mxu0 %v1640
        %1647 = vmatprep.subr.mxu0 0.0
        %1648 = vmatpush1.msra.mxu0 0.0
        %1649 = vmatprep.subr.mxu0 0.0
        %1650 = vmatpush1.msra.mxu0 0.0
        %1651 = vmatprep.subr.mxu0 0.0
        %1652 = vmatpush1.msra.mxu0 0.0
        %1653 = vmatprep.subr.mxu0 0.0
        %1654 = vmatpush1.msra.mxu0 0.0
        %1655 = vmatprep.subr.mxu0 0.0
        %1656 = vmatpush1.msra.mxu0 0.0
        %1657 = vmatprep.subr.mxu0 0.0
        %1658 = vmatpush1.msra.mxu0 0.0
        %1659 = vmatprep.subr.mxu0 0.0
        %1660 = vmatpush1.msra.mxu0 0.0
        %1661 = vmatprep.subr.mxu0 0.0
        %1662 = vmatpush1.msra.mxu0 0.0
        %1663 = vmatprep.subr.mxu0 0.0
        %1664 = vmatpush1.msra.mxu0 0.0
        %1665 = vmatprep.subr.mxu0 0.0
        %1666 = vmatpush1.msra.mxu0 0.0
        %1667 = vmatprep.subr.mxu0 0.0
        %1668 = vmatpush1.msra.mxu0 0.0
        %1669 = vmatprep.subr.mxu0 0.0
        %1670 = vmatpush1.msra.mxu0 0.0
        %1671 = vmatprep.subr.mxu0 0.0
        %1672 = vmatpush1.msra.mxu0 0.0
        %1673 = vmatprep.subr.mxu0 0.0
        %1674 = vmatpush1.msra.mxu0 0.0
        %1675 = vmatprep.subr.mxu0 0.0
        %1676 = vmatpush1.msra.mxu0 0.0
        %1677 = vmatprep.subr.mxu0 0.0
        %1678 = vmatpush1.msra.mxu0 0.0
        %1679 = vmatprep.subr.mxu0 0.0
        %1680 = vmatpush1.msra.mxu0 0.0
        %1681 = vmatprep.subr.mxu0 0.0
        %1682 = vmatpush1.msra.mxu0 0.0
        %1683 = vmatprep.subr.mxu0 0.0
        %1684 = vmatpush1.msra.mxu0 0.0
        %1685 = vmatprep.subr.mxu0 0.0
        %1686 = vmatpush1.msra.mxu0 0.0
        %1687 = vmatprep.subr.mxu0 0.0
        %1688 = vmatpush1.msra.mxu0 0.0
        %1689 = vmatprep.subr.mxu0 0.0
        %1690 = vmatpush1.msra.mxu0 0.0
        %1691 = vmatprep.subr.mxu0 0.0
        %1692 = vmatpush1.msra.mxu0 0.0
        %1693 = vmatprep.subr.mxu0 0.0
        %1694 = vmatpush1.msra.mxu0 0.0
        %1695 = vmatprep.subr.mxu0 0.0
        %1696 = vmatpush1.msra.mxu0 0.0
        %1697 = vmatprep.subr.mxu0 0.0
        %1698 = vmatpush1.msra.mxu0 0.0
        %1699 = vmatprep.subr.mxu0 0.0
        %1700 = vmatpush1.msra.mxu0 0.0
        %1701 = vmatprep.subr.mxu0 0.0
        %1702 = vmatpush1.msra.mxu0 0.0
        %1703 = vmatprep.subr.mxu0 0.0
        %1704 = vmatpush1.msra.mxu0 0.0
        %1705 = vmatprep.subr.mxu0 0.0
        %1706 = vmatpush1.msra.mxu0 0.0
        %1707 = vmatprep.subr.mxu0 0.0
        %1708 = vmatpush1.msra.mxu0 0.0
        %1709 = vmatprep.mubr.f32.mxu0 0.0
        %1710 = vmatmul.mubr.f32.gmra.mrb[0].mxu0 %v1637
        %v1711 = vpop.f32.mrb[0].mxu0
        %v1712 = vadd.f32 0.0, %v1711
        %v1713 = vpop.f32.mrb[0].mxu0
        %v1714 = vadd.f32 0.0, %v1713
        %1715 = vdwg.mxu0
        %v1716 = vadd.f32 %v1624, %v1712
        %v1717 = vadd.f32 %v1625, %v1714
        %1718 = vrot.lane.b32.xlu0 %v1085, 112
        %v1719 = vpop.permute.xlu0 %1718
        %1720 = vrot.lane.b32.xlu0 %v1086, 112
        %v1721 = vpop.permute.xlu0 %1720
        %v1722 = vsel %vm887, %v1719, %v1721
        %v1723 = vsel %vm887, %v1721, %v1719
        %v1724 = vsel %vm892, %v1722, 0.0
        %v1725 = vsel %vm893, %v1723, 0.0
        %s1726 = scalar_lea.vmem %s3, 28
        %v1727 = vld [vmem:[%s1726] sm:$0xf]
        %v1729 = vsel %vm251, %v1727, 0
        %v1732 = vsel %vm255, %v1724, 0
        %v1735 = vsel %vm255, %v1725, 0
        %1737 = vmatprep.subr.mxu0 %v1735
        %1738 = vmatpush1.msra.mxu0 %v1732
        %1739 = vmatprep.subr.mxu0 0.0
        %1740 = vmatpush1.msra.mxu0 0.0
        %1741 = vmatprep.subr.mxu0 0.0
        %1742 = vmatpush1.msra.mxu0 0.0
        %1743 = vmatprep.subr.mxu0 0.0
        %1744 = vmatpush1.msra.mxu0 0.0
        %1745 = vmatprep.subr.mxu0 0.0
        %1746 = vmatpush1.msra.mxu0 0.0
        %1747 = vmatprep.subr.mxu0 0.0
        %1748 = vmatpush1.msra.mxu0 0.0
        %1749 = vmatprep.subr.mxu0 0.0
        %1750 = vmatpush1.msra.mxu0 0.0
        %1751 = vmatprep.subr.mxu0 0.0
        %1752 = vmatpush1.msra.mxu0 0.0
        %1753 = vmatprep.subr.mxu0 0.0
        %1754 = vmatpush1.msra.mxu0 0.0
        %1755 = vmatprep.subr.mxu0 0.0
        %1756 = vmatpush1.msra.mxu0 0.0
        %1757 = vmatprep.subr.mxu0 0.0
        %1758 = vmatpush1.msra.mxu0 0.0
        %1759 = vmatprep.subr.mxu0 0.0
        %1760 = vmatpush1.msra.mxu0 0.0
        %1761 = vmatprep.subr.mxu0 0.0
        %1762 = vmatpush1.msra.mxu0 0.0
        %1763 = vmatprep.subr.mxu0 0.0
        %1764 = vmatpush1.msra.mxu0 0.0
        %1765 = vmatprep.subr.mxu0 0.0
        %1766 = vmatpush1.msra.mxu0 0.0
        %1767 = vmatprep.subr.mxu0 0.0
        %1768 = vmatpush1.msra.mxu0 0.0
        %1769 = vmatprep.subr.mxu0 0.0
        %1770 = vmatpush1.msra.mxu0 0.0
        %1771 = vmatprep.subr.mxu0 0.0
        %1772 = vmatpush1.msra.mxu0 0.0
        %1773 = vmatprep.subr.mxu0 0.0
        %1774 = vmatpush1.msra.mxu0 0.0
        %1775 = vmatprep.subr.mxu0 0.0
        %1776 = vmatpush1.msra.mxu0 0.0
        %1777 = vmatprep.subr.mxu0 0.0
        %1778 = vmatpush1.msra.mxu0 0.0
        %1779 = vmatprep.subr.mxu0 0.0
        %1780 = vmatpush1.msra.mxu0 0.0
        %1781 = vmatprep.subr.mxu0 0.0
        %1782 = vmatpush1.msra.mxu0 0.0
        %1783 = vmatprep.subr.mxu0 0.0
        %1784 = vmatpush1.msra.mxu0 0.0
        %1785 = vmatprep.subr.mxu0 0.0
        %1786 = vmatpush1.msra.mxu0 0.0
        %1787 = vmatprep.subr.mxu0 0.0
        %1788 = vmatpush1.msra.mxu0 0.0
        %1789 = vmatprep.subr.mxu0 0.0
        %1790 = vmatpush1.msra.mxu0 0.0
        %1791 = vmatprep.subr.mxu0 0.0
        %1792 = vmatpush1.msra.mxu0 0.0
        %1793 = vmatprep.subr.mxu0 0.0
        %1794 = vmatpush1.msra.mxu0 0.0
        %1795 = vmatprep.subr.mxu0 0.0
        %1796 = vmatpush1.msra.mxu0 0.0
        %1797 = vmatprep.subr.mxu0 0.0
        %1798 = vmatpush1.msra.mxu0 0.0
        %1799 = vmatprep.subr.mxu0 0.0
        %1800 = vmatpush1.msra.mxu0 0.0
        %1801 = vmatprep.mubr.f32.mxu0 0.0
        %1802 = vmatmul.mubr.f32.gmra.mrb[0].mxu0 %v1729
        %v1803 = vpop.f32.mrb[0].mxu0
        %v1804 = vadd.f32 0.0, %v1803
        %v1805 = vpop.f32.mrb[0].mxu0
        %v1806 = vadd.f32 0.0, %v1805
        %1807 = vdwg.mxu0
        %v1808 = vadd.f32 %v1716, %v1804
        %v1809 = vadd.f32 %v1717, %v1806
        %1810 = vrot.lane.b32.xlu0 %v1085, 111
        %v1811 = vpop.permute.xlu0 %1810
        %1812 = vrot.lane.b32.xlu0 %v1086, 111
        %v1813 = vpop.permute.xlu0 %1812
        %v1814 = vsel %vm984, %v1811, %v1813
        %v1815 = vsel %vm984, %v1813, %v1811
        %v1816 = vsel %vm989, %v1814, 0.0
        %v1817 = vsel %vm990, %v1815, 0.0
        %s1818 = scalar_lea.vmem %s3, 32
        %v1819 = vld [vmem:[%s1818] sm:$0xf]
        %v1821 = vsel %vm251, %v1819, 0
        %v1824 = vsel %vm255, %v1816, 0
        %v1827 = vsel %vm255, %v1817, 0
        %1829 = vmatprep.subr.mxu0 %v1827
        %1830 = vmatpush1.msra.mxu0 %v1824
        %1831 = vmatprep.subr.mxu0 0.0
        %1832 = vmatpush1.msra.mxu0 0.0
        %1833 = vmatprep.subr.mxu0 0.0
        %1834 = vmatpush1.msra.mxu0 0.0
        %1835 = vmatprep.subr.mxu0 0.0
        %1836 = vmatpush1.msra.mxu0 0.0
        %1837 = vmatprep.subr.mxu0 0.0
        %1838 = vmatpush1.msra.mxu0 0.0
        %1839 = vmatprep.subr.mxu0 0.0
        %1840 = vmatpush1.msra.mxu0 0.0
        %1841 = vmatprep.subr.mxu0 0.0
        %1842 = vmatpush1.msra.mxu0 0.0
        %1843 = vmatprep.subr.mxu0 0.0
        %1844 = vmatpush1.msra.mxu0 0.0
        %1845 = vmatprep.subr.mxu0 0.0
        %1846 = vmatpush1.msra.mxu0 0.0
        %1847 = vmatprep.subr.mxu0 0.0
        %1848 = vmatpush1.msra.mxu0 0.0
        %1849 = vmatprep.subr.mxu0 0.0
        %1850 = vmatpush1.msra.mxu0 0.0
        %1851 = vmatprep.subr.mxu0 0.0
        %1852 = vmatpush1.msra.mxu0 0.0
        %1853 = vmatprep.subr.mxu0 0.0
        %1854 = vmatpush1.msra.mxu0 0.0
        %1855 = vmatprep.subr.mxu0 0.0
        %1856 = vmatpush1.msra.mxu0 0.0
        %1857 = vmatprep.subr.mxu0 0.0
        %1858 = vmatpush1.msra.mxu0 0.0
        %1859 = vmatprep.subr.mxu0 0.0
        %1860 = vmatpush1.msra.mxu0 0.0
        %1861 = vmatprep.subr.mxu0 0.0
        %1862 = vmatpush1.msra.mxu0 0.0
        %1863 = vmatprep.subr.mxu0 0.0
        %1864 = vmatpush1.msra.mxu0 0.0
        %1865 = vmatprep.subr.mxu0 0.0
        %1866 = vmatpush1.msra.mxu0 0.0
        %1867 = vmatprep.subr.mxu0 0.0
        %1868 = vmatpush1.msra.mxu0 0.0
        %1869 = vmatprep.subr.mxu0 0.0
        %1870 = vmatpush1.msra.mxu0 0.0
        %1871 = vmatprep.subr.mxu0 0.0
        %1872 = vmatpush1.msra.mxu0 0.0
        %1873 = vmatprep.subr.mxu0 0.0
        %1874 = vmatpush1.msra.mxu0 0.0
        %1875 = vmatprep.subr.mxu0 0.0
        %1876 = vmatpush1.msra.mxu0 0.0
        %1877 = vmatprep.subr.mxu0 0.0
        %1878 = vmatpush1.msra.mxu0 0.0
        %1879 = vmatprep.subr.mxu0 0.0
        %1880 = vmatpush1.msra.mxu0 0.0
        %1881 = vmatprep.subr.mxu0 0.0
        %1882 = vmatpush1.msra.mxu0 0.0
        %1883 = vmatprep.subr.mxu0 0.0
        %1884 = vmatpush1.msra.mxu0 0.0
        %1885 = vmatprep.subr.mxu0 0.0
        %1886 = vmatpush1.msra.mxu0 0.0
        %1887 = vmatprep.subr.mxu0 0.0
        %1888 = vmatpush1.msra.mxu0 0.0
        %1889 = vmatprep.subr.mxu0 0.0
        %1890 = vmatpush1.msra.mxu0 0.0
        %1891 = vmatprep.subr.mxu0 0.0
        %1892 = vmatpush1.msra.mxu0 0.0
        %1893 = vmatprep.mubr.f32.mxu0 0.0
        %1894 = vmatmul.mubr.f32.gmra.mrb[0].mxu0 %v1821
        %v1895 = vpop.f32.mrb[0].mxu0
        %v1896 = vadd.f32 0.0, %v1895
        %v1897 = vpop.f32.mrb[0].mxu0
        %v1898 = vadd.f32 0.0, %v1897
        %1899 = vdwg.mxu0
        %v1900 = vadd.f32 %v1808, %v1896
        %v1901 = vadd.f32 %v1809, %v1898
        %v1903 = vcombine.high %v217, %v217
        %v1905 = vadd.f32 %v1900, %v217
        %v1906 = vadd.f32 %v1901, %v1903
        %v1909 = vcombine.low %v1905, %v1906
        %1911 = vst [vmem:[%s190] sm:$0xff] %v1909
        %s1912 = sand.u32 %s115, 1
        %s1913 = scalar_lea.sflag [#allocation3], %s1912
        %s1914 = sand.u32 %s115, 1
        %s1915 = smul.addr %s1914, 8
        %s1916 = scalar_lea.vmem [#allocation2], %s1915
        // Predicated region
        $region37: #{tpu_custom_call.1} parent=35 // pred_check
          %p1917 = pneg %p125
        $region38: #{tpu_custom_call.1} parent=35 // pred_check_branch
          %1919 = sbr.rel (%p1917) target = $region40
        $region39: #{tpu_custom_call.1} parent=35 // pred_region
          %s1921 = ssub.s32 128, 128
          %1922 = vsyncadd %s1913, %s1921
          %s1923 = smul.addr %s18, 2
          %s1924 = smul.addr %s1923, 64
          %s1925 = scalar_lea.hbm %s4, %s1924
          %s1927 = sshll.u32 %s1916, 4
          %s1928 = int_to_ptr.vmem [resolvable:$true] %s1927
          %1930 = dma.vmem_to_hbm [thread:$0]  %s1928, 128, %s1925, %s1913
        $region40: #{tpu_custom_call.1} parent=35 // pred_fallthru
          _
      $region36: #{tpu_custom_call.1} parent=5 // pred_fallthru
        _
      %p1931 = scmp.le.s32.totalorder 2, %s13
      // Predicated region
      $region41: #{tpu_custom_call.1} parent=5 // pred_check
        %p1932 = pneg %p1931
      $region42: #{tpu_custom_call.1} parent=5 // pred_check_branch
        %1934 = sbr.rel (%p1932) target = $region44
      $region43: #{tpu_custom_call.1} parent=5 // pred_region
        %s1935 = ssub.s32 %s13, 2
        // Predicated region
        $region45: #{tpu_custom_call.1} parent=43 // pred_check
          %p1936 = pneg %p131
        $region46: #{tpu_custom_call.1} parent=43 // pred_check_branch
          %1938 = sbr.rel (%p1936) target = $region48
        $region47: #{tpu_custom_call.1} parent=43 // pred_region
          %s1939 = sand.u32 %s116, 1
          %s1940 = scalar_lea.sflag [#allocation3], %s1939
          %s1941 = sand.u32 %s116, 1
          %s1942 = smul.addr %s1941, 8
          %s1943 = scalar_lea.vmem [#allocation2], %s1942
          %1944 = dma.done %s1940, 128
        $region48: #{tpu_custom_call.1} parent=43 // pred_fallthru
          _
      $region44: #{tpu_custom_call.1} parent=5 // pred_fallthru
        _
    $region6: #{tpu_custom_call.1} parent=1 // loop_footer
      %s17 = sadd.s32 1, %s13
    $region7: #{tpu_custom_call.1} parent=1 // loop_footer_branch
      %12 = sbr.rel target = $region3
    $region8: #{tpu_custom_call.1} parent=1 // loop_exit
      _
    %1945 = vsyncpa [#allocation3], 1
    %s1946 = scalar_lea.sflag [#allocation3], 1
    %1947 = vsyncpa %s1946, 1

</llo_original>
